<compile_context>
chip_gen: v7x
topology: tpu7x:2x2x1
jax: 0.10.0
libtpu: 0.0.40
codegen_flags: <defaults>
</compile_context>

<pallas_src>
import numpy as np
import jax
import jax.numpy as jnp
from jax.experimental import pallas as pl
from jax.experimental.pallas import tpu as pltpu

# ----------------------- configuration (the `params` object) -----------------------
B = 2                      # batch_size
SPATIAL_C = 3              # channels of spatial_data_x
N_SCALAR = 1               # scalar covariates broadcast to grids
C_IN = SPATIAL_C + N_SCALAR   # conv input channels
C_OUT = 4                  # conv output channels
K = 3                      # kernel_size (stride=1, padding=1 -> "same")
IMG = 16                   # image_dim
HID = 32                   # dense_dim_hidden
N_MOVE = 12                # num_movement_params
PIXEL = 25.0               # pixel_size
HW = IMG * IMG             # 256 lanes per image
IMG2 = IMG // 2            # 8   (after maxpool 1)
IMG4 = IMG // 4            # 4   (after maxpool 2)
NPIX = IMG4 * IMG4         # 16
DENSE_IN = C_OUT * NPIX    # dense_dim_in_all = 64

LANES_W = 128              # lane width of the weight slab / padded FC width
CONV_K = 9 * B * C_IN      # 72 contraction rows for a whole-batch 3x3 conv
N_L1 = 2 * B * C_OUT       # habitat-conv1 + movement-conv1 fused output rows

assert C_IN == C_OUT, "shared layer-1 tap stacking assumes equal conv row counts"
assert CONV_K + 1 <= LANES_W
assert IMG % 4 == 0        # stride-2/4 pool "sites" never wrap around the 256 lanes

# --------------------- packed weight-slab row offsets (static) ---------------------
OFF_WC1 = 0
OFF_WH2 = OFF_WC1 + N_L1
OFF_WH3 = OFF_WH2 + B * C_OUT
OFF_WM2 = OFF_WH3 + B * 1
OFF_GCAT = OFF_WM2 + B * C_OUT
OFF_MMASK = OFF_GCAT + HW
OFF_Q = OFF_MMASK + B * C_OUT
OFF_FB1 = OFF_Q + C_OUT * HID
OFF_FW2 = OFF_FB1 + 1
OFF_FB2 = OFF_FW2 + LANES_W
OFF_FW3 = OFF_FB2 + 1
OFF_FB3 = OFF_FW3 + LANES_W
WSLAB_ROWS = OFF_FB3 + 1

# ----------------------------- grid-slab row offsets -----------------------------
OFF_M16 = 0
OFF_MS2 = 9
OFF_DIST = 18
OFF_LDIST = 19
OFF_COSB = 20
OFF_SINB = 21
GSLAB_ROWS = 24            # 22 used rows, padded to a multiple of 8


# ----------------------------- host-side constant tables -----------------------------
def _host_tables():
    """Grid slab (border masks + distance/bearing grids) and the pool-2 site selector."""
    y = np.arange(HW) // IMG
    x = np.arange(HW) % IMG
    site2 = (y % 2 == 0) & (x % 2 == 0)          # stride-2 "sites" hold pool-1 results
    py, px = y // 2, x // 2
    m16 = np.zeros((9, HW), np.float32)           # dense 16x16 conv validity masks
    ms2 = np.zeros((9, HW), np.float32)           # stride-2-embedded 8x8 conv masks
    k = 0
    for dy in (-1, 0, 1):
        for dx in (-1, 0, 1):
            m16[k] = ((y + dy >= 0) & (y + dy < IMG) &
                      (x + dx >= 0) & (x + dx < IMG)).astype(np.float32)
            ms2[k] = (site2 & (py + dy >= 0) & (py + dy < IMG2) &
                      (px + dx >= 0) & (px + dx < IMG2)).astype(np.float32)
            k += 1
    # select the stride-4 sites (pool-2 results), PyTorch (y, x) flatten order
    sel2 = np.zeros((HW, NPIX), np.float32)
    for qy in range(IMG4):
        for qx in range(IMG4):
            sel2[4 * IMG * qy + 4 * qx, IMG4 * qy + qx] = 1.0

    # Params_to_Grid_Block constant grids
    center = IMG // 2
    yy, xx = np.indices((IMG, IMG))
    dist = np.sqrt((PIXEL * (xx - center)) ** 2 + (PIXEL * (yy - center)) ** 2)
    dist[center, center] = 0.56 * PIXEL
    bear = np.arctan2(center - yy, xx - center)

    gslab = np.concatenate([
        m16, ms2,
        dist.reshape(1, HW).astype(np.float32),
        np.log(dist).reshape(1, HW).astype(np.float32),
        np.cos(bear).reshape(1, HW).astype(np.float32),
        np.sin(bear).reshape(1, HW).astype(np.float32),
    ], axis=0).astype(np.float32)
    gslab = np.pad(gslab, ((0, GSLAB_ROWS - gslab.shape[0]), (0, 0)))
    return jnp.asarray(gslab), sel2


def _conv_offset_blockdiag(w):
    """(Co, Ci, 3, 3) conv weight -> (9, B*Co, B*Ci) block-diag-over-batch matrices."""
    co, ci = w.shape[0], w.shape[1]
    wk = jnp.transpose(w, (2, 3, 0, 1)).reshape(9, co, ci)       # [ky*3+kx, co, ci]
    eye = jnp.eye(B, dtype=w.dtype)
    return jnp.einsum("bd,kij->kbidj", eye, wk).reshape(9, B * co, B * ci)


def _conv_weight_packed(w, b):
    """Pack one conv layer into a (B*Co, 128) row block: 72 tap cols + bias col + 0."""
    co, ci = w.shape[0], w.shape[1]
    bd = _conv_offset_blockdiag(w)                                # (9, B*co, B*ci)
    wcat = jnp.transpose(bd, (1, 0, 2)).reshape(B * co, 9 * B * ci)
    bias = jnp.tile(b, B).reshape(B * co, 1)                      # row b*co + o -> b[o]
    pad = jnp.zeros((B * co, LANES_W - 9 * B * ci - 1), jnp.float32)
    return jnp.concatenate([wcat, bias, pad], axis=1)             # (B*co, 128)


def _pad_rows_cols(a, rows, cols):
    out = jnp.zeros((rows, cols), jnp.float32)
    return out.at[:a.shape[0], :a.shape[1]].set(a.astype(jnp.float32))


def prepare_params(params, sel2_np):
    """Pack every weight / bias / selection matrix into one (WSLAB_ROWS, 128) slab."""
    hw1, hb1, hw2, hb2, hw3, hb3 = params["habitat"]
    mw1, mb1, mw2, mb2 = params["move_conv"]
    fw1, fb1, fw2, fb2, fw3, fb3 = params["fc"]

    wc1 = jnp.concatenate([_conv_weight_packed(hw1, hb1),
                           _conv_weight_packed(mw1, mb1)], axis=0)     # (16, 128)
    wh2 = _conv_weight_packed(hw2, hb2)                                 # (8, 128)
    wh3 = _conv_weight_packed(hw3, hb3)                                 # (2, 128)
    wm2 = _conv_weight_packed(mw2, mb2)                                 # (8, 128)

    # fold sel2 + flatten into FC layer 1: Gcat[s, c*HID + j] = sel2[s,:] @ fw1[c*NPIX:(c+1)*NPIX, j]
    fw1cat = jnp.transpose(fw1.reshape(C_OUT, NPIX, HID), (1, 0, 2)).reshape(NPIX, C_OUT * HID)
    gcat = jnp.asarray(sel2_np) @ fw1cat                                # (256, 128)

    mmask = np.zeros((B * C_OUT, C_OUT * HID), np.float32)              # channel-diag blocks
    for b in range(B):
        for c in range(C_OUT):
            mmask[b * C_OUT + c, c * HID:(c + 1) * HID] = 1.0
    qpad = np.zeros((C_OUT * HID, LANES_W), np.float32)                 # channel-block sum
    qpad[:, :HID] = np.tile(np.eye(HID, dtype=np.float32), (C_OUT, 1))

    slab = jnp.concatenate([
        wc1, wh2, wh3, wm2,
        gcat.astype(jnp.float32),
        jnp.asarray(mmask), jnp.asarray(qpad),
        _pad_rows_cols(fb1.reshape(1, -1), 1, LANES_W),
        _pad_rows_cols(fw2, LANES_W, LANES_W),
        _pad_rows_cols(fb2.reshape(1, -1), 1, LANES_W),
        _pad_rows_cols(fw3, LANES_W, LANES_W),
        _pad_rows_cols(fb3.reshape(1, -1), 1, LANES_W),
    ], axis=0)
    assert slab.shape == (WSLAB_ROWS, LANES_W), slab.shape
    return slab


# ----------------------------- the single fused kernel -----------------------------
def _fused_kernel(x_ref, bear_ref, g_ref, w_ref, out_ref):
    f32 = jnp.float32
    x = x_ref[...]                          # (B*C_IN, 256) lane-dense, one image per row
    bear = bear_ref[...]                    # (B, 1)
    g = g_ref[...]                          # (GSLAB_ROWS, 256)
    m16 = g[OFF_M16:OFF_M16 + 9, :]
    ms2 = g[OFF_MS2:OFF_MS2 + 9, :]
    dist = g[OFF_DIST:OFF_DIST + 1, :]
    ldist = g[OFF_LDIST:OFF_LDIST + 1, :]
    cosb = g[OFF_COSB:OFF_COSB + 1, :]
    sinb = g[OFF_SINB:OFF_SINB + 1, :]

    # hoisted constant pad block (row 72 = "ones" bias row; weight cols 73.. are zero)
    ones_pad = jnp.ones((LANES_W - CONV_K, HW), f32)

    def stack_taps(a, masks, row_step, col_step):
        """9 rolled + border-masked copies stacked along sublanes, padded to K=128."""
        tiles = []
        k = 0
        for dy in (-1, 0, 1):
            for dx in (-1, 0, 1):
                d = row_step * dy + col_step * dx
                nb = a if d == 0 else pltpu.roll(a, shift=(-d) % HW, axis=1)
                tiles.append(nb * masks[k:k + 1, :])
                k += 1
        tiles.append(ones_pad)
        return jnp.concatenate(tiles, axis=0)              # (128, 256)

    def conv_mm(stacked, w_row0, n_out):
        """One MXU matmul per conv layer (bias folded into column 72 of the weight)."""
        w = w_ref[w_row0:w_row0 + n_out, :]                 # (n_out, 128)
        return jnp.dot(w.astype(jnp.bfloat16), stacked.astype(jnp.bfloat16),
                       preferred_element_type=f32)          # (n_out, 256)

    def pool_max(a, col_step, row_step):
        """2x2/stride-2 max-pool; valid at every 2*row_step/2*col_step site."""
        h = jnp.maximum(a, pltpu.roll(a, shift=HW - col_step, axis=1))
        return jnp.maximum(h, pltpu.roll(h, shift=HW - row_step, axis=1))

    def lane_logsumexp(v):
        vmax = jnp.max(v, axis=1, keepdims=True)
        return vmax + jnp.log(jnp.sum(jnp.exp(v - vmax), axis=1, keepdims=True))

    # ---- shared layer 1: habitat conv1 + movement conv1 in one matmul ----
    sx = stack_taps(x, m16, IMG, 1)
    l1 = jnp.maximum(conv_mm(sx, OFF_WC1, N_L1), 0.0)       # (16, 256)
    h_hab = l1[:B * C_OUT, :]
    h_mov = l1[B * C_OUT:, :]

    # ---- habitat branch: 2 more convs + spatial log-softmax ----
    h = jnp.maximum(conv_mm(stack_taps(h_hab, m16, IMG, 1), OFF_WH2, B * C_OUT), 0.0)
    h = conv_mm(stack_taps(h, m16, IMG, 1), OFF_WH3, B)     # (B, 256)
    hab = h - lane_logsumexp(h)

    # ---- movement branch: pool, conv, pool, then FC (sel2 + flatten folded) ----
    m = pool_max(h_mov, 1, IMG)                             # pooled at stride-2 sites
    m = jnp.maximum(conv_mm(stack_taps(m, ms2, 2 * IMG, 2), OFF_WM2, B * C_OUT), 0.0)
    m = pool_max(m, 2, 2 * IMG)                             # pooled at stride-4 sites

    gcat = w_ref[OFF_GCAT:OFF_GCAT + HW, :]                 # (256, 128)
    z = jnp.dot(m, gcat, preferred_element_type=f32)        # (B*C_OUT, C_OUT*HID)
    z = z * w_ref[OFF_MMASK:OFF_MMASK + B * C_OUT, :]       # keep channel-diagonal blocks
    y = jnp.dot(z, w_ref[OFF_Q:OFF_Q + C_OUT * HID, :],
                preferred_element_type=f32)                 # (B*C_OUT, 128)
    h1 = jnp.concatenate(
        [jnp.sum(y[b * C_OUT:(b + 1) * C_OUT, :], axis=0, keepdims=True)
         for b in range(B)], axis=0)                        # (B, 128)
    h1 = jnp.maximum(h1 + w_ref[OFF_FB1:OFF_FB1 + 1, :], 0.0)
    h2 = jnp.maximum(jnp.dot(h1, w_ref[OFF_FW2:OFF_FW2 + LANES_W, :],
                             preferred_element_type=f32)
                     + w_ref[OFF_FB2:OFF_FB2 + 1, :], 0.0)
    pmv = jnp.dot(h2, w_ref[OFF_FW3:OFF_FW3 + LANES_W, :],
                  preferred_element_type=f32) + w_ref[OFF_FB3:OFF_FB3 + 1, :]
    # pmv: (B, 128); lanes 0..11 hold the 12 movement parameters (dropout = identity)

    # ---- in-kernel special functions on the per-sample parameters ----
    LOG_2PI = float(np.log(2.0 * np.pi))
    TWO_PI = float(2.0 * np.pi)

    def lgamma_pos(zv):
        # lgamma(z) = lgamma(z + 8) - sum_{k=0..7} log(z + k), Stirling on z + 8 >= 8
        acc = jnp.log(zv)
        for kk in range(1, 8):
            acc = acc + jnp.log(zv + float(kk))
        zs = zv + 8.0
        zi = 1.0 / zs
        zi2 = zi * zi
        series = zi * (1.0 / 12.0 + zi2 * (-1.0 / 360.0 + zi2 * (1.0 / 1260.0)))
        return (zs - 0.5) * jnp.log(zs) - zs + 0.5 * LOG_2PI + series - acc

    def log_i0(v):
        # Abramowitz & Stegun 9.8.1 / 9.8.2
        t = jnp.minimum(v, 3.75) * (1.0 / 3.75)
        t2 = t * t
        small = jnp.log(1.0 + t2 * (3.5156229 + t2 * (3.0899424 + t2 * (1.2067492
                      + t2 * (0.2659732 + t2 * (0.0360768 + t2 * 0.0045813))))))
        xl = jnp.maximum(v, 3.75)
        u = 3.75 / xl
        poly = (0.39894228 + u * (0.01328592 + u * (0.00225319 + u * (-0.00157565
               + u * (0.00916281 + u * (-0.02057706 + u * (0.02635537
               + u * (-0.01647633 + u * 0.00392377))))))))
        large = xl - 0.5 * jnp.log(xl) + jnp.log(poly)
        return jnp.where(v <= 3.75, small, large)

    def sincos(v):
        # range-reduce to [-pi, pi], then Taylor series (abs err ~1e-5, fine for f32)
        r = v - jnp.floor(v * (1.0 / TWO_PI) + 0.5) * TWO_PI
        r2 = r * r
        s = r * (1.0 + r2 * (-1.0 / 6.0 + r2 * (1.0 / 120.0 + r2 * (-1.0 / 5040.0
              + r2 * (1.0 / 362880.0 + r2 * (-1.0 / 39916800.0
              + r2 * (1.0 / 6227020800.0)))))))
        c = 1.0 + r2 * (-0.5 + r2 * (1.0 / 24.0 + r2 * (-1.0 / 720.0
              + r2 * (1.0 / 40320.0 + r2 * (-1.0 / 3628800.0
              + r2 * (1.0 / 479001600.0 + r2 * (-1.0 / 87178291200.0)))))))
        return s, c

    # gamma mixture
    shape1 = jnp.exp(pmv[:, 0:1]); scale1 = jnp.exp(pmv[:, 1:2])
    shape2 = jnp.exp(pmv[:, 3:4]); scale2 = jnp.exp(pmv[:, 4:5]) * 500.0
    a1 = jnp.exp(pmv[:, 2:3]); a2 = jnp.exp(pmv[:, 5:6])
    am = jnp.maximum(a1, a2)
    e1 = jnp.exp(a1 - am); e2 = jnp.exp(a2 - am)
    einv = 1.0 / (e1 + e2)
    gw1 = e1 * einv; gw2 = e2 * einv
    c1 = -lgamma_pos(shape1) - shape1 * jnp.log(scale1)
    c2 = -lgamma_pos(shape2) - shape2 * jnp.log(scale2)
    gd1 = c1 + (shape1 - 1.0) * ldist - dist * (1.0 / scale1)
    gd2 = c2 + (shape2 - 1.0) * ldist - dist * (1.0 / scale2)
    mg = jnp.maximum(gd1, gd2)
    gamma_layer = mg + jnp.log(gw1 * jnp.exp(gd1 - mg) + gw2 * jnp.exp(gd2 - mg))

    # von Mises mixture
    mu1 = pmv[:, 6:7] + bear; kappa1 = jnp.exp(pmv[:, 7:8])
    mu2 = pmv[:, 9:10] + bear; kappa2 = jnp.exp(pmv[:, 10:11])
    b1 = jnp.exp(pmv[:, 8:9]); b2 = jnp.exp(pmv[:, 11:12])
    bm = jnp.maximum(b1, b2)
    f1 = jnp.exp(b1 - bm); f2 = jnp.exp(b2 - bm)
    finv = 1.0 / (f1 + f2)
    vw1 = f1 * finv; vw2 = f2 * finv
    cvm1 = -(LOG_2PI + log_i0(kappa1))
    cvm2 = -(LOG_2PI + log_i0(kappa2))
    s1, co1 = sincos(mu1)
    s2, co2 = sincos(mu2)
    vd1 = kappa1 * (cosb * co1 + sinb * s1) + cvm1
    vd2 = kappa2 * (cosb * co2 + sinb * s2) + cvm2
    mv = jnp.maximum(vd1, vd2)
    vm_layer = mv + jnp.log(vw1 * jnp.exp(vd1 - mv) + vw2 * jnp.exp(vd2 - mv))

    grid = gamma_layer + vm_layer
    mov = grid - lane_logsumexp(grid)

    out_ref[0:B, :] = hab
    out_ref[B:2 * B, :] = mov


# ----------------------------- full forward pass -----------------------------
@jax.jit
def conv_joint_model_forward(wslab, gslab, spatial, scalars, bearing):
    # Scalar_to_Grid_Block + channel concat -> lane-dense [B*C, H*W] input tile
    scalar_grids = jnp.broadcast_to(scalars[:, :, None, None].astype(jnp.float32),
                                    (B, N_SCALAR, IMG, IMG))
    all_spatial = jnp.concatenate([spatial.astype(jnp.float32), scalar_grids], axis=1)
    x_flat = all_spatial.reshape(B * C_IN, HW)
    bear = bearing.astype(jnp.float32).reshape(B, 1)

    fused = pl.pallas_call(
        _fused_kernel,
        out_shape=jax.ShapeDtypeStruct((2 * B, HW), jnp.float32),
    )(x_flat, bear, gslab, wslab)

    habitat = fused[:B].reshape(B, IMG, IMG)
    movement = fused[B:].reshape(B, IMG, IMG)
    # match the PyTorch module output: torch.stack((habitat, movement), dim=-1)
    return jnp.stack([habitat, movement], axis=-1)            # (B, H, W, 2)


# ----------------------------- main -----------------------------
if __name__ == "__main__":
    key = jax.random.PRNGKey(0)
    ks = jax.random.split(key, 20)

    def uinit(k, shape, fan_in):
        bound = 1.0 / np.sqrt(fan_in)
        return jax.random.uniform(k, shape, jnp.float32, -bound, bound)

    params = {
        "habitat": (
            uinit(ks[0], (C_OUT, C_IN, K, K), C_IN * K * K),
            uinit(ks[1], (C_OUT,), C_IN * K * K),
            uinit(ks[2], (C_OUT, C_OUT, K, K), C_OUT * K * K),
            uinit(ks[3], (C_OUT,), C_OUT * K * K),
            uinit(ks[4], (1, C_OUT, K, K), C_OUT * K * K),
            uinit(ks[5], (1,), C_OUT * K * K),
        ),
        "move_conv": (
            uinit(ks[6], (C_OUT, C_IN, K, K), C_IN * K * K),
            uinit(ks[7], (C_OUT,), C_IN * K * K),
            uinit(ks[8], (C_OUT, C_OUT, K, K), C_OUT * K * K),
            uinit(ks[9], (C_OUT,), C_OUT * K * K),
        ),
        "fc": (  # weights stored as [in, out]; y = x @ W + b
            uinit(ks[10], (DENSE_IN, HID), DENSE_IN),
            uinit(ks[11], (HID,), DENSE_IN),
            uinit(ks[12], (HID, HID), HID),
            uinit(ks[13], (HID,), HID),
            uinit(ks[14], (HID, N_MOVE), HID),
            uinit(ks[15], (N_MOVE,), HID),
        ),
    }

    gslab, sel2_np = _host_tables()
    wslab = prepare_params(params, sel2_np)

    # example inputs: x = (spatial_data_x, scalars_to_grid, bearing_x)
    spatial = jax.random.normal(ks[16], (B, SPATIAL_C, IMG, IMG), jnp.float32)
    scalars = jax.random.normal(ks[17], (B, N_SCALAR), jnp.float32)
    bearing = jax.random.uniform(ks[18], (B, 1), jnp.float32, -np.pi, np.pi)

    out = conv_joint_model_forward(wslab, gslab, spatial, scalars, bearing)
    out = jax.block_until_ready(out)
    assert out.shape == (B, IMG, IMG, 2), out.shape
    assert bool(jnp.all(jnp.isfinite(out)))
    print("KERNEL_OK")
</pallas_src>

<mosaic_0001>
module attributes {stable_mosaic.version = 11 : i64} {
  func.func @_fused_kernel(%arg0: memref<8x256xf32, #tpu.memory_space<vmem>>, %arg1: memref<2x1xf32, #tpu.memory_space<vmem>>, %arg2: memref<24x256xf32, #tpu.memory_space<vmem>>, %arg3: memref<685x128xf32, #tpu.memory_space<vmem>>, %arg4: memref<4x256xf32, #tpu.memory_space<vmem>>) attributes {dimension_semantics = [], scalar_prefetch = 0 : i64, scratch_operands = 0 : i64, tpu.core_type = #tpu.core_type<tc>} {
    %c0 = arith.constant 0 : index
    %c0_0 = arith.constant 0 : index
    %0 = vector.load %arg0[%c0, %c0_0] : memref<8x256xf32, #tpu.memory_space<vmem>>, vector<8x256xf32>
    %c0_1 = arith.constant 0 : index
    %c0_2 = arith.constant 0 : index
    %1 = vector.load %arg1[%c0_1, %c0_2] : memref<2x1xf32, #tpu.memory_space<vmem>>, vector<2x1xf32>
    %c0_3 = arith.constant 0 : index
    %c0_4 = arith.constant 0 : index
    %2 = vector.load %arg2[%c0_3, %c0_4] : memref<24x256xf32, #tpu.memory_space<vmem>>, vector<24x256xf32>
    %3 = vector.extract_strided_slice %2 {offsets = [0, 0], sizes = [9, 256], strides = [1, 1]} : vector<24x256xf32> to vector<9x256xf32>
    %4 = vector.extract_strided_slice %2 {offsets = [9, 0], sizes = [9, 256], strides = [1, 1]} : vector<24x256xf32> to vector<9x256xf32>
    %5 = vector.extract_strided_slice %2 {offsets = [18, 0], sizes = [1, 256], strides = [1, 1]} : vector<24x256xf32> to vector<1x256xf32>
    %6 = vector.extract_strided_slice %2 {offsets = [19, 0], sizes = [1, 256], strides = [1, 1]} : vector<24x256xf32> to vector<1x256xf32>
    %7 = vector.extract_strided_slice %2 {offsets = [20, 0], sizes = [1, 256], strides = [1, 1]} : vector<24x256xf32> to vector<1x256xf32>
    %8 = vector.extract_strided_slice %2 {offsets = [21, 0], sizes = [1, 256], strides = [1, 1]} : vector<24x256xf32> to vector<1x256xf32>
    %cst = arith.constant 1.000000e+00 : f32
    %9 = vector.broadcast %cst : f32 to vector<56x256xf32>
    %c17_i32 = arith.constant 17 : i32
    %10 = tpu.dynamic_rotate %0 by %c17_i32 dim 1 : vector<8x256xf32>, i32 -> vector<8x256xf32>
    %11 = vector.extract_strided_slice %3 {offsets = [0, 0], sizes = [1, 256], strides = [1, 1]} : vector<9x256xf32> to vector<1x256xf32>
    %12 = vector.broadcast %11 : vector<1x256xf32> to vector<8x256xf32>
    %13 = arith.mulf %10, %12 : vector<8x256xf32>
    %c16_i32 = arith.constant 16 : i32
    %14 = tpu.dynamic_rotate %0 by %c16_i32 dim 1 : vector<8x256xf32>, i32 -> vector<8x256xf32>
    %15 = vector.extract_strided_slice %3 {offsets = [1, 0], sizes = [1, 256], strides = [1, 1]} : vector<9x256xf32> to vector<1x256xf32>
    %16 = vector.broadcast %15 : vector<1x256xf32> to vector<8x256xf32>
    %17 = arith.mulf %14, %16 : vector<8x256xf32>
    %c15_i32 = arith.constant 15 : i32
    %18 = tpu.dynamic_rotate %0 by %c15_i32 dim 1 : vector<8x256xf32>, i32 -> vector<8x256xf32>
    %19 = vector.extract_strided_slice %3 {offsets = [2, 0], sizes = [1, 256], strides = [1, 1]} : vector<9x256xf32> to vector<1x256xf32>
    %20 = vector.broadcast %19 : vector<1x256xf32> to vector<8x256xf32>
    %21 = arith.mulf %18, %20 : vector<8x256xf32>
    %c1_i32 = arith.constant 1 : i32
    %22 = tpu.dynamic_rotate %0 by %c1_i32 dim 1 : vector<8x256xf32>, i32 -> vector<8x256xf32>
    %23 = vector.extract_strided_slice %3 {offsets = [3, 0], sizes = [1, 256], strides = [1, 1]} : vector<9x256xf32> to vector<1x256xf32>
    %24 = vector.broadcast %23 : vector<1x256xf32> to vector<8x256xf32>
    %25 = arith.mulf %22, %24 : vector<8x256xf32>
    %26 = vector.extract_strided_slice %3 {offsets = [4, 0], sizes = [1, 256], strides = [1, 1]} : vector<9x256xf32> to vector<1x256xf32>
    %27 = vector.broadcast %26 : vector<1x256xf32> to vector<8x256xf32>
    %28 = arith.mulf %0, %27 : vector<8x256xf32>
    %c255_i32 = arith.constant 255 : i32
    %29 = tpu.dynamic_rotate %0 by %c255_i32 dim 1 : vector<8x256xf32>, i32 -> vector<8x256xf32>
    %30 = vector.extract_strided_slice %3 {offsets = [5, 0], sizes = [1, 256], strides = [1, 1]} : vector<9x256xf32> to vector<1x256xf32>
    %31 = vector.broadcast %30 : vector<1x256xf32> to vector<8x256xf32>
    %32 = arith.mulf %29, %31 : vector<8x256xf32>
    %c241_i32 = arith.constant 241 : i32
    %33 = tpu.dynamic_rotate %0 by %c241_i32 dim 1 : vector<8x256xf32>, i32 -> vector<8x256xf32>
    %34 = vector.extract_strided_slice %3 {offsets = [6, 0], sizes = [1, 256], strides = [1, 1]} : vector<9x256xf32> to vector<1x256xf32>
    %35 = vector.broadcast %34 : vector<1x256xf32> to vector<8x256xf32>
    %36 = arith.mulf %33, %35 : vector<8x256xf32>
    %c240_i32 = arith.constant 240 : i32
    %37 = tpu.dynamic_rotate %0 by %c240_i32 dim 1 : vector<8x256xf32>, i32 -> vector<8x256xf32>
    %38 = vector.extract_strided_slice %3 {offsets = [7, 0], sizes = [1, 256], strides = [1, 1]} : vector<9x256xf32> to vector<1x256xf32>
    %39 = vector.broadcast %38 : vector<1x256xf32> to vector<8x256xf32>
    %40 = arith.mulf %37, %39 : vector<8x256xf32>
    %c239_i32 = arith.constant 239 : i32
    %41 = tpu.dynamic_rotate %0 by %c239_i32 dim 1 : vector<8x256xf32>, i32 -> vector<8x256xf32>
    %42 = vector.extract_strided_slice %3 {offsets = [8, 0], sizes = [1, 256], strides = [1, 1]} : vector<9x256xf32> to vector<1x256xf32>
    %43 = vector.broadcast %42 : vector<1x256xf32> to vector<8x256xf32>
    %44 = arith.mulf %41, %43 : vector<8x256xf32>
    %45 = tpu.concatenate %13, %17, %21, %25, %28, %32, %36, %40, %44, %9 in 0 : vector<8x256xf32>, vector<8x256xf32>, vector<8x256xf32>, vector<8x256xf32>, vector<8x256xf32>, vector<8x256xf32>, vector<8x256xf32>, vector<8x256xf32>, vector<8x256xf32>, vector<56x256xf32> -> vector<128x256xf32>
    %c0_5 = arith.constant 0 : index
    %c0_6 = arith.constant 0 : index
    %46 = vector.load %arg3[%c0_5, %c0_6] : memref<685x128xf32, #tpu.memory_space<vmem>>, vector<16x128xf32>
    %47 = arith.truncf %46 : vector<16x128xf32> to vector<16x128xbf16>
    %48 = arith.truncf %45 : vector<128x256xf32> to vector<128x256xbf16>
    %cst_7 = arith.constant dense<0.000000e+00> : vector<16x256xf32>
    %49 = tpu.matmul %47, %48, %cst_7 {dimension_numbers = #tpu.dot_dimension_numbers<[1], [0], [0], [1], [0, 0, 1, 1], [], []>} : vector<16x128xbf16>, vector<128x256xbf16>, vector<16x256xf32> -> vector<16x256xf32>
    %cst_8 = arith.constant 0.000000e+00 : f32
    %50 = vector.broadcast %cst_8 : f32 to vector<16x256xf32>
    %51 = arith.maximumf %49, %50 : vector<16x256xf32>
    %52 = vector.extract_strided_slice %51 {offsets = [0, 0], sizes = [8, 256], strides = [1, 1]} : vector<16x256xf32> to vector<8x256xf32>
    %53 = vector.extract_strided_slice %51 {offsets = [8, 0], sizes = [8, 256], strides = [1, 1]} : vector<16x256xf32> to vector<8x256xf32>
    %c17_i32_9 = arith.constant 17 : i32
    %54 = tpu.dynamic_rotate %52 by %c17_i32_9 dim 1 : vector<8x256xf32>, i32 -> vector<8x256xf32>
    %55 = vector.extract_strided_slice %3 {offsets = [0, 0], sizes = [1, 256], strides = [1, 1]} : vector<9x256xf32> to vector<1x256xf32>
    %56 = vector.broadcast %55 : vector<1x256xf32> to vector<8x256xf32>
    %57 = arith.mulf %54, %56 : vector<8x256xf32>
    %c16_i32_10 = arith.constant 16 : i32
    %58 = tpu.dynamic_rotate %52 by %c16_i32_10 dim 1 : vector<8x256xf32>, i32 -> vector<8x256xf32>
    %59 = vector.extract_strided_slice %3 {offsets = [1, 0], sizes = [1, 256], strides = [1, 1]} : vector<9x256xf32> to vector<1x256xf32>
    %60 = vector.broadcast %59 : vector<1x256xf32> to vector<8x256xf32>
    %61 = arith.mulf %58, %60 : vector<8x256xf32>
    %c15_i32_11 = arith.constant 15 : i32
    %62 = tpu.dynamic_rotate %52 by %c15_i32_11 dim 1 : vector<8x256xf32>, i32 -> vector<8x256xf32>
    %63 = vector.extract_strided_slice %3 {offsets = [2, 0], sizes = [1, 256], strides = [1, 1]} : vector<9x256xf32> to vector<1x256xf32>
    %64 = vector.broadcast %63 : vector<1x256xf32> to vector<8x256xf32>
    %65 = arith.mulf %62, %64 : vector<8x256xf32>
    %c1_i32_12 = arith.constant 1 : i32
    %66 = tpu.dynamic_rotate %52 by %c1_i32_12 dim 1 : vector<8x256xf32>, i32 -> vector<8x256xf32>
    %67 = vector.extract_strided_slice %3 {offsets = [3, 0], sizes = [1, 256], strides = [1, 1]} : vector<9x256xf32> to vector<1x256xf32>
    %68 = vector.broadcast %67 : vector<1x256xf32> to vector<8x256xf32>
    %69 = arith.mulf %66, %68 : vector<8x256xf32>
    %70 = vector.extract_strided_slice %3 {offsets = [4, 0], sizes = [1, 256], strides = [1, 1]} : vector<9x256xf32> to vector<1x256xf32>
    %71 = vector.broadcast %70 : vector<1x256xf32> to vector<8x256xf32>
    %72 = arith.mulf %52, %71 : vector<8x256xf32>
    %c255_i32_13 = arith.constant 255 : i32
    %73 = tpu.dynamic_rotate %52 by %c255_i32_13 dim 1 : vector<8x256xf32>, i32 -> vector<8x256xf32>
    %74 = vector.extract_strided_slice %3 {offsets = [5, 0], sizes = [1, 256], strides = [1, 1]} : vector<9x256xf32> to vector<1x256xf32>
    %75 = vector.broadcast %74 : vector<1x256xf32> to vector<8x256xf32>
    %76 = arith.mulf %73, %75 : vector<8x256xf32>
    %c241_i32_14 = arith.constant 241 : i32
    %77 = tpu.dynamic_rotate %52 by %c241_i32_14 dim 1 : vector<8x256xf32>, i32 -> vector<8x256xf32>
    %78 = vector.extract_strided_slice %3 {offsets = [6, 0], sizes = [1, 256], strides = [1, 1]} : vector<9x256xf32> to vector<1x256xf32>
    %79 = vector.broadcast %78 : vector<1x256xf32> to vector<8x256xf32>
    %80 = arith.mulf %77, %79 : vector<8x256xf32>
    %c240_i32_15 = arith.constant 240 : i32
    %81 = tpu.dynamic_rotate %52 by %c240_i32_15 dim 1 : vector<8x256xf32>, i32 -> vector<8x256xf32>
    %82 = vector.extract_strided_slice %3 {offsets = [7, 0], sizes = [1, 256], strides = [1, 1]} : vector<9x256xf32> to vector<1x256xf32>
    %83 = vector.broadcast %82 : vector<1x256xf32> to vector<8x256xf32>
    %84 = arith.mulf %81, %83 : vector<8x256xf32>
    %c239_i32_16 = arith.constant 239 : i32
    %85 = tpu.dynamic_rotate %52 by %c239_i32_16 dim 1 : vector<8x256xf32>, i32 -> vector<8x256xf32>
    %86 = vector.extract_strided_slice %3 {offsets = [8, 0], sizes = [1, 256], strides = [1, 1]} : vector<9x256xf32> to vector<1x256xf32>
    %87 = vector.broadcast %86 : vector<1x256xf32> to vector<8x256xf32>
    %88 = arith.mulf %85, %87 : vector<8x256xf32>
    %89 = tpu.concatenate %57, %61, %65, %69, %72, %76, %80, %84, %88, %9 in 0 : vector<8x256xf32>, vector<8x256xf32>, vector<8x256xf32>, vector<8x256xf32>, vector<8x256xf32>, vector<8x256xf32>, vector<8x256xf32>, vector<8x256xf32>, vector<8x256xf32>, vector<56x256xf32> -> vector<128x256xf32>
    %c16 = arith.constant 16 : index
    %c0_17 = arith.constant 0 : index
    %90 = vector.load %arg3[%c16, %c0_17] : memref<685x128xf32, #tpu.memory_space<vmem>>, vector<8x128xf32>
    %91 = arith.truncf %90 : vector<8x128xf32> to vector<8x128xbf16>
    %92 = arith.truncf %89 : vector<128x256xf32> to vector<128x256xbf16>
    %cst_18 = arith.constant dense<0.000000e+00> : vector<8x256xf32>
    %93 = tpu.matmul %91, %92, %cst_18 {dimension_numbers = #tpu.dot_dimension_numbers<[1], [0], [0], [1], [0, 0, 1, 1], [], []>} : vector<8x128xbf16>, vector<128x256xbf16>, vector<8x256xf32> -> vector<8x256xf32>
    %cst_19 = arith.constant 0.000000e+00 : f32
    %94 = vector.broadcast %cst_19 : f32 to vector<8x256xf32>
    %95 = arith.maximumf %93, %94 : vector<8x256xf32>
    %c17_i32_20 = arith.constant 17 : i32
    %96 = tpu.dynamic_rotate %95 by %c17_i32_20 dim 1 : vector<8x256xf32>, i32 -> vector<8x256xf32>
    %97 = vector.extract_strided_slice %3 {offsets = [0, 0], sizes = [1, 256], strides = [1, 1]} : vector<9x256xf32> to vector<1x256xf32>
    %98 = vector.broadcast %97 : vector<1x256xf32> to vector<8x256xf32>
    %99 = arith.mulf %96, %98 : vector<8x256xf32>
    %c16_i32_21 = arith.constant 16 : i32
    %100 = tpu.dynamic_rotate %95 by %c16_i32_21 dim 1 : vector<8x256xf32>, i32 -> vector<8x256xf32>
    %101 = vector.extract_strided_slice %3 {offsets = [1, 0], sizes = [1, 256], strides = [1, 1]} : vector<9x256xf32> to vector<1x256xf32>
    %102 = vector.broadcast %101 : vector<1x256xf32> to vector<8x256xf32>
    %103 = arith.mulf %100, %102 : vector<8x256xf32>
    %c15_i32_22 = arith.constant 15 : i32
    %104 = tpu.dynamic_rotate %95 by %c15_i32_22 dim 1 : vector<8x256xf32>, i32 -> vector<8x256xf32>
    %105 = vector.extract_strided_slice %3 {offsets = [2, 0], sizes = [1, 256], strides = [1, 1]} : vector<9x256xf32> to vector<1x256xf32>
    %106 = vector.broadcast %105 : vector<1x256xf32> to vector<8x256xf32>
    %107 = arith.mulf %104, %106 : vector<8x256xf32>
    %c1_i32_23 = arith.constant 1 : i32
    %108 = tpu.dynamic_rotate %95 by %c1_i32_23 dim 1 : vector<8x256xf32>, i32 -> vector<8x256xf32>
    %109 = vector.extract_strided_slice %3 {offsets = [3, 0], sizes = [1, 256], strides = [1, 1]} : vector<9x256xf32> to vector<1x256xf32>
    %110 = vector.broadcast %109 : vector<1x256xf32> to vector<8x256xf32>
    %111 = arith.mulf %108, %110 : vector<8x256xf32>
    %112 = vector.extract_strided_slice %3 {offsets = [4, 0], sizes = [1, 256], strides = [1, 1]} : vector<9x256xf32> to vector<1x256xf32>
    %113 = vector.broadcast %112 : vector<1x256xf32> to vector<8x256xf32>
    %114 = arith.mulf %95, %113 : vector<8x256xf32>
    %c255_i32_24 = arith.constant 255 : i32
    %115 = tpu.dynamic_rotate %95 by %c255_i32_24 dim 1 : vector<8x256xf32>, i32 -> vector<8x256xf32>
    %116 = vector.extract_strided_slice %3 {offsets = [5, 0], sizes = [1, 256], strides = [1, 1]} : vector<9x256xf32> to vector<1x256xf32>
    %117 = vector.broadcast %116 : vector<1x256xf32> to vector<8x256xf32>
    %118 = arith.mulf %115, %117 : vector<8x256xf32>
    %c241_i32_25 = arith.constant 241 : i32
    %119 = tpu.dynamic_rotate %95 by %c241_i32_25 dim 1 : vector<8x256xf32>, i32 -> vector<8x256xf32>
    %120 = vector.extract_strided_slice %3 {offsets = [6, 0], sizes = [1, 256], strides = [1, 1]} : vector<9x256xf32> to vector<1x256xf32>
    %121 = vector.broadcast %120 : vector<1x256xf32> to vector<8x256xf32>
    %122 = arith.mulf %119, %121 : vector<8x256xf32>
    %c240_i32_26 = arith.constant 240 : i32
    %123 = tpu.dynamic_rotate %95 by %c240_i32_26 dim 1 : vector<8x256xf32>, i32 -> vector<8x256xf32>
    %124 = vector.extract_strided_slice %3 {offsets = [7, 0], sizes = [1, 256], strides = [1, 1]} : vector<9x256xf32> to vector<1x256xf32>
    %125 = vector.broadcast %124 : vector<1x256xf32> to vector<8x256xf32>
    %126 = arith.mulf %123, %125 : vector<8x256xf32>
    %c239_i32_27 = arith.constant 239 : i32
    %127 = tpu.dynamic_rotate %95 by %c239_i32_27 dim 1 : vector<8x256xf32>, i32 -> vector<8x256xf32>
    %128 = vector.extract_strided_slice %3 {offsets = [8, 0], sizes = [1, 256], strides = [1, 1]} : vector<9x256xf32> to vector<1x256xf32>
    %129 = vector.broadcast %128 : vector<1x256xf32> to vector<8x256xf32>
    %130 = arith.mulf %127, %129 : vector<8x256xf32>
    %131 = tpu.concatenate %99, %103, %107, %111, %114, %118, %122, %126, %130, %9 in 0 : vector<8x256xf32>, vector<8x256xf32>, vector<8x256xf32>, vector<8x256xf32>, vector<8x256xf32>, vector<8x256xf32>, vector<8x256xf32>, vector<8x256xf32>, vector<8x256xf32>, vector<56x256xf32> -> vector<128x256xf32>
    %c24 = arith.constant 24 : index
    %c0_28 = arith.constant 0 : index
    %132 = vector.load %arg3[%c24, %c0_28] : memref<685x128xf32, #tpu.memory_space<vmem>>, vector<2x128xf32>
    %133 = arith.truncf %132 : vector<2x128xf32> to vector<2x128xbf16>
    %134 = arith.truncf %131 : vector<128x256xf32> to vector<128x256xbf16>
    %cst_29 = arith.constant dense<0.000000e+00> : vector<2x256xf32>
    %135 = tpu.matmul %133, %134, %cst_29 {dimension_numbers = #tpu.dot_dimension_numbers<[1], [0], [0], [1], [0, 0, 1, 1], [], []>} : vector<2x128xbf16>, vector<128x256xbf16>, vector<2x256xf32> -> vector<2x256xf32>
    %cst_30 = arith.constant dense<0xFF800000> : vector<2xf32>
    %136 = vector.multi_reduction <maximumf>, %135, %cst_30 [1] : vector<2x256xf32> to vector<2xf32>
    %137 = vector.shape_cast %136 : vector<2xf32> to vector<2x1xf32>
    %138 = vector.broadcast %137 : vector<2x1xf32> to vector<2x256xf32>
    %139 = arith.subf %135, %138 : vector<2x256xf32>
    %140 = math.exp %139 : vector<2x256xf32>
    %cst_31 = arith.constant dense<0.000000e+00> : vector<2xf32>
    %141 = vector.multi_reduction <add>, %140, %cst_31 [1] : vector<2x256xf32> to vector<2xf32>
    %142 = vector.shape_cast %141 : vector<2xf32> to vector<2x1xf32>
    %143 = math.log %142 : vector<2x1xf32>
    %144 = arith.addf %137, %143 : vector<2x1xf32>
    %145 = vector.broadcast %144 : vector<2x1xf32> to vector<2x256xf32>
    %146 = arith.subf %135, %145 : vector<2x256xf32>
    %c255_i32_32 = arith.constant 255 : i32
    %147 = tpu.dynamic_rotate %53 by %c255_i32_32 dim 1 : vector<8x256xf32>, i32 -> vector<8x256xf32>
    %148 = arith.maximumf %53, %147 : vector<8x256xf32>
    %c240_i32_33 = arith.constant 240 : i32
    %149 = tpu.dynamic_rotate %148 by %c240_i32_33 dim 1 : vector<8x256xf32>, i32 -> vector<8x256xf32>
    %150 = arith.maximumf %148, %149 : vector<8x256xf32>
    %c34_i32 = arith.constant 34 : i32
    %151 = tpu.dynamic_rotate %150 by %c34_i32 dim 1 : vector<8x256xf32>, i32 -> vector<8x256xf32>
    %152 = vector.extract_strided_slice %4 {offsets = [0, 0], sizes = [1, 256], strides = [1, 1]} : vector<9x256xf32> to vector<1x256xf32>
    %153 = vector.broadcast %152 : vector<1x256xf32> to vector<8x256xf32>
    %154 = arith.mulf %151, %153 : vector<8x256xf32>
    %c32_i32 = arith.constant 32 : i32
    %155 = tpu.dynamic_rotate %150 by %c32_i32 dim 1 : vector<8x256xf32>, i32 -> vector<8x256xf32>
    %156 = vector.extract_strided_slice %4 {offsets = [1, 0], sizes = [1, 256], strides = [1, 1]} : vector<9x256xf32> to vector<1x256xf32>
    %157 = vector.broadcast %156 : vector<1x256xf32> to vector<8x256xf32>
    %158 = arith.mulf %155, %157 : vector<8x256xf32>
    %c30_i32 = arith.constant 30 : i32
    %159 = tpu.dynamic_rotate %150 by %c30_i32 dim 1 : vector<8x256xf32>, i32 -> vector<8x256xf32>
    %160 = vector.extract_strided_slice %4 {offsets = [2, 0], sizes = [1, 256], strides = [1, 1]} : vector<9x256xf32> to vector<1x256xf32>
    %161 = vector.broadcast %160 : vector<1x256xf32> to vector<8x256xf32>
    %162 = arith.mulf %159, %161 : vector<8x256xf32>
    %c2_i32 = arith.constant 2 : i32
    %163 = tpu.dynamic_rotate %150 by %c2_i32 dim 1 : vector<8x256xf32>, i32 -> vector<8x256xf32>
    %164 = vector.extract_strided_slice %4 {offsets = [3, 0], sizes = [1, 256], strides = [1, 1]} : vector<9x256xf32> to vector<1x256xf32>
    %165 = vector.broadcast %164 : vector<1x256xf32> to vector<8x256xf32>
    %166 = arith.mulf %163, %165 : vector<8x256xf32>
    %167 = vector.extract_strided_slice %4 {offsets = [4, 0], sizes = [1, 256], strides = [1, 1]} : vector<9x256xf32> to vector<1x256xf32>
    %168 = vector.broadcast %167 : vector<1x256xf32> to vector<8x256xf32>
    %169 = arith.mulf %150, %168 : vector<8x256xf32>
    %c254_i32 = arith.constant 254 : i32
    %170 = tpu.dynamic_rotate %150 by %c254_i32 dim 1 : vector<8x256xf32>, i32 -> vector<8x256xf32>
    %171 = vector.extract_strided_slice %4 {offsets = [5, 0], sizes = [1, 256], strides = [1, 1]} : vector<9x256xf32> to vector<1x256xf32>
    %172 = vector.broadcast %171 : vector<1x256xf32> to vector<8x256xf32>
    %173 = arith.mulf %170, %172 : vector<8x256xf32>
    %c226_i32 = arith.constant 226 : i32
    %174 = tpu.dynamic_rotate %150 by %c226_i32 dim 1 : vector<8x256xf32>, i32 -> vector<8x256xf32>
    %175 = vector.extract_strided_slice %4 {offsets = [6, 0], sizes = [1, 256], strides = [1, 1]} : vector<9x256xf32> to vector<1x256xf32>
    %176 = vector.broadcast %175 : vector<1x256xf32> to vector<8x256xf32>
    %177 = arith.mulf %174, %176 : vector<8x256xf32>
    %c224_i32 = arith.constant 224 : i32
    %178 = tpu.dynamic_rotate %150 by %c224_i32 dim 1 : vector<8x256xf32>, i32 -> vector<8x256xf32>
    %179 = vector.extract_strided_slice %4 {offsets = [7, 0], sizes = [1, 256], strides = [1, 1]} : vector<9x256xf32> to vector<1x256xf32>
    %180 = vector.broadcast %179 : vector<1x256xf32> to vector<8x256xf32>
    %181 = arith.mulf %178, %180 : vector<8x256xf32>
    %c222_i32 = arith.constant 222 : i32
    %182 = tpu.dynamic_rotate %150 by %c222_i32 dim 1 : vector<8x256xf32>, i32 -> vector<8x256xf32>
    %183 = vector.extract_strided_slice %4 {offsets = [8, 0], sizes = [1, 256], strides = [1, 1]} : vector<9x256xf32> to vector<1x256xf32>
    %184 = vector.broadcast %183 : vector<1x256xf32> to vector<8x256xf32>
    %185 = arith.mulf %182, %184 : vector<8x256xf32>
    %186 = tpu.concatenate %154, %158, %162, %166, %169, %173, %177, %181, %185, %9 in 0 : vector<8x256xf32>, vector<8x256xf32>, vector<8x256xf32>, vector<8x256xf32>, vector<8x256xf32>, vector<8x256xf32>, vector<8x256xf32>, vector<8x256xf32>, vector<8x256xf32>, vector<56x256xf32> -> vector<128x256xf32>
    %c26 = arith.constant 26 : index
    %c0_34 = arith.constant 0 : index
    %187 = vector.load %arg3[%c26, %c0_34] : memref<685x128xf32, #tpu.memory_space<vmem>>, vector<8x128xf32>
    %188 = arith.truncf %187 : vector<8x128xf32> to vector<8x128xbf16>
    %189 = arith.truncf %186 : vector<128x256xf32> to vector<128x256xbf16>
    %cst_35 = arith.constant dense<0.000000e+00> : vector<8x256xf32>
    %190 = tpu.matmul %188, %189, %cst_35 {dimension_numbers = #tpu.dot_dimension_numbers<[1], [0], [0], [1], [0, 0, 1, 1], [], []>} : vector<8x128xbf16>, vector<128x256xbf16>, vector<8x256xf32> -> vector<8x256xf32>
    %cst_36 = arith.constant 0.000000e+00 : f32
    %191 = vector.broadcast %cst_36 : f32 to vector<8x256xf32>
    %192 = arith.maximumf %190, %191 : vector<8x256xf32>
    %c254_i32_37 = arith.constant 254 : i32
    %193 = tpu.dynamic_rotate %192 by %c254_i32_37 dim 1 : vector<8x256xf32>, i32 -> vector<8x256xf32>
    %194 = arith.maximumf %192, %193 : vector<8x256xf32>
    %c224_i32_38 = arith.constant 224 : i32
    %195 = tpu.dynamic_rotate %194 by %c224_i32_38 dim 1 : vector<8x256xf32>, i32 -> vector<8x256xf32>
    %196 = arith.maximumf %194, %195 : vector<8x256xf32>
    %c34 = arith.constant 34 : index
    %c0_39 = arith.constant 0 : index
    %197 = vector.load %arg3[%c34, %c0_39] : memref<685x128xf32, #tpu.memory_space<vmem>>, vector<256x128xf32>
    %cst_40 = arith.constant dense<0.000000e+00> : vector<8x128xf32>
    %198 = tpu.matmul %196, %197, %cst_40 {dimension_numbers = #tpu.dot_dimension_numbers<[1], [0], [0], [1], [0, 0, 1, 1], [], []>} : vector<8x256xf32>, vector<256x128xf32>, vector<8x128xf32> -> vector<8x128xf32>
    %c290 = arith.constant 290 : index
    %c0_41 = arith.constant 0 : index
    %199 = vector.load %arg3[%c290, %c0_41] : memref<685x128xf32, #tpu.memory_space<vmem>>, vector<8x128xf32>
    %200 = arith.mulf %198, %199 : vector<8x128xf32>
    %c298 = arith.constant 298 : index
    %c0_42 = arith.constant 0 : index
    %201 = vector.load %arg3[%c298, %c0_42] : memref<685x128xf32, #tpu.memory_space<vmem>>, vector<128x128xf32>
    %cst_43 = arith.constant dense<0.000000e+00> : vector<8x128xf32>
    %202 = tpu.matmul %200, %201, %cst_43 {dimension_numbers = #tpu.dot_dimension_numbers<[1], [0], [0], [1], [0, 0, 1, 1], [], []>} : vector<8x128xf32>, vector<128x128xf32>, vector<8x128xf32> -> vector<8x128xf32>
    %203 = vector.extract_strided_slice %202 {offsets = [0, 0], sizes = [4, 128], strides = [1, 1]} : vector<8x128xf32> to vector<4x128xf32>
    %cst_44 = arith.constant dense<0.000000e+00> : vector<128xf32>
    %204 = vector.multi_reduction <add>, %203, %cst_44 [0] : vector<4x128xf32> to vector<128xf32>
    %205 = vector.shape_cast %204 : vector<128xf32> to vector<1x128xf32>
    %206 = vector.extract_strided_slice %202 {offsets = [4, 0], sizes = [4, 128], strides = [1, 1]} : vector<8x128xf32> to vector<4x128xf32>
    %cst_45 = arith.constant dense<0.000000e+00> : vector<128xf32>
    %207 = vector.multi_reduction <add>, %206, %cst_45 [0] : vector<4x128xf32> to vector<128xf32>
    %208 = vector.shape_cast %207 : vector<128xf32> to vector<1x128xf32>
    %209 = tpu.concatenate %205, %208 in 0 : vector<1x128xf32>, vector<1x128xf32> -> vector<2x128xf32>
    %c426 = arith.constant 426 : index
    %c0_46 = arith.constant 0 : index
    %210 = vector.load %arg3[%c426, %c0_46] : memref<685x128xf32, #tpu.memory_space<vmem>>, vector<1x128xf32>
    %211 = vector.broadcast %210 : vector<1x128xf32> to vector<2x128xf32>
    %212 = arith.addf %209, %211 : vector<2x128xf32>
    %cst_47 = arith.constant 0.000000e+00 : f32
    %213 = vector.broadcast %cst_47 : f32 to vector<2x128xf32>
    %214 = arith.maximumf %212, %213 : vector<2x128xf32>
    %c427 = arith.constant 427 : index
    %c0_48 = arith.constant 0 : index
    %215 = vector.load %arg3[%c427, %c0_48] : memref<685x128xf32, #tpu.memory_space<vmem>>, vector<128x128xf32>
    %cst_49 = arith.constant dense<0.000000e+00> : vector<2x128xf32>
    %216 = tpu.matmul %214, %215, %cst_49 {dimension_numbers = #tpu.dot_dimension_numbers<[1], [0], [0], [1], [0, 0, 1, 1], [], []>} : vector<2x128xf32>, vector<128x128xf32>, vector<2x128xf32> -> vector<2x128xf32>
    %c555 = arith.constant 555 : index
    %c0_50 = arith.constant 0 : index
    %217 = vector.load %arg3[%c555, %c0_50] : memref<685x128xf32, #tpu.memory_space<vmem>>, vector<1x128xf32>
    %218 = vector.broadcast %217 : vector<1x128xf32> to vector<2x128xf32>
    %219 = arith.addf %216, %218 : vector<2x128xf32>
    %cst_51 = arith.constant 0.000000e+00 : f32
    %220 = vector.broadcast %cst_51 : f32 to vector<2x128xf32>
    %221 = arith.maximumf %219, %220 : vector<2x128xf32>
    %c556 = arith.constant 556 : index
    %c0_52 = arith.constant 0 : index
    %222 = vector.load %arg3[%c556, %c0_52] : memref<685x128xf32, #tpu.memory_space<vmem>>, vector<128x128xf32>
    %cst_53 = arith.constant dense<0.000000e+00> : vector<2x128xf32>
    %223 = tpu.matmul %221, %222, %cst_53 {dimension_numbers = #tpu.dot_dimension_numbers<[1], [0], [0], [1], [0, 0, 1, 1], [], []>} : vector<2x128xf32>, vector<128x128xf32>, vector<2x128xf32> -> vector<2x128xf32>
    %c684 = arith.constant 684 : index
    %c0_54 = arith.constant 0 : index
    %224 = vector.load %arg3[%c684, %c0_54] : memref<685x128xf32, #tpu.memory_space<vmem>>, vector<1x128xf32>
    %225 = vector.broadcast %224 : vector<1x128xf32> to vector<2x128xf32>
    %226 = arith.addf %223, %225 : vector<2x128xf32>
    %227 = vector.extract_strided_slice %226 {offsets = [0, 0], sizes = [2, 1], strides = [1, 1]} : vector<2x128xf32> to vector<2x1xf32>
    %228 = math.exp %227 : vector<2x1xf32>
    %229 = vector.extract_strided_slice %226 {offsets = [0, 1], sizes = [2, 1], strides = [1, 1]} : vector<2x128xf32> to vector<2x1xf32>
    %230 = math.exp %229 : vector<2x1xf32>
    %231 = vector.extract_strided_slice %226 {offsets = [0, 3], sizes = [2, 1], strides = [1, 1]} : vector<2x128xf32> to vector<2x1xf32>
    %232 = math.exp %231 : vector<2x1xf32>
    %233 = vector.extract_strided_slice %226 {offsets = [0, 4], sizes = [2, 1], strides = [1, 1]} : vector<2x128xf32> to vector<2x1xf32>
    %234 = math.exp %233 : vector<2x1xf32>
    %cst_55 = arith.constant 5.000000e+02 : f32
    %235 = vector.broadcast %cst_55 : f32 to vector<2x1xf32>
    %236 = arith.mulf %234, %235 : vector<2x1xf32>
    %237 = vector.extract_strided_slice %226 {offsets = [0, 2], sizes = [2, 1], strides = [1, 1]} : vector<2x128xf32> to vector<2x1xf32>
    %238 = math.exp %237 : vector<2x1xf32>
    %239 = vector.extract_strided_slice %226 {offsets = [0, 5], sizes = [2, 1], strides = [1, 1]} : vector<2x128xf32> to vector<2x1xf32>
    %240 = math.exp %239 : vector<2x1xf32>
    %241 = arith.maximumf %238, %240 : vector<2x1xf32>
    %242 = arith.subf %238, %241 : vector<2x1xf32>
    %243 = math.exp %242 : vector<2x1xf32>
    %244 = arith.subf %240, %241 : vector<2x1xf32>
    %245 = math.exp %244 : vector<2x1xf32>
    %246 = arith.addf %243, %245 : vector<2x1xf32>
    %cst_56 = arith.constant 1.000000e+00 : f32
    %247 = vector.broadcast %cst_56 : f32 to vector<2x1xf32>
    %248 = arith.divf %247, %246 : vector<2x1xf32>
    %249 = arith.mulf %243, %248 : vector<2x1xf32>
    %250 = arith.mulf %245, %248 : vector<2x1xf32>
    %251 = math.log %228 : vector<2x1xf32>
    %cst_57 = arith.constant 1.000000e+00 : f32
    %252 = vector.broadcast %cst_57 : f32 to vector<2x1xf32>
    %253 = arith.addf %228, %252 : vector<2x1xf32>
    %254 = math.log %253 : vector<2x1xf32>
    %255 = arith.addf %251, %254 : vector<2x1xf32>
    %cst_58 = arith.constant 2.000000e+00 : f32
    %256 = vector.broadcast %cst_58 : f32 to vector<2x1xf32>
    %257 = arith.addf %228, %256 : vector<2x1xf32>
    %258 = math.log %257 : vector<2x1xf32>
    %259 = arith.addf %255, %258 : vector<2x1xf32>
    %cst_59 = arith.constant 3.000000e+00 : f32
    %260 = vector.broadcast %cst_59 : f32 to vector<2x1xf32>
    %261 = arith.addf %228, %260 : vector<2x1xf32>
    %262 = math.log %261 : vector<2x1xf32>
    %263 = arith.addf %259, %262 : vector<2x1xf32>
    %cst_60 = arith.constant 4.000000e+00 : f32
    %264 = vector.broadcast %cst_60 : f32 to vector<2x1xf32>
    %265 = arith.addf %228, %264 : vector<2x1xf32>
    %266 = math.log %265 : vector<2x1xf32>
    %267 = arith.addf %263, %266 : vector<2x1xf32>
    %cst_61 = arith.constant 5.000000e+00 : f32
    %268 = vector.broadcast %cst_61 : f32 to vector<2x1xf32>
    %269 = arith.addf %228, %268 : vector<2x1xf32>
    %270 = math.log %269 : vector<2x1xf32>
    %271 = arith.addf %267, %270 : vector<2x1xf32>
    %cst_62 = arith.constant 6.000000e+00 : f32
    %272 = vector.broadcast %cst_62 : f32 to vector<2x1xf32>
    %273 = arith.addf %228, %272 : vector<2x1xf32>
    %274 = math.log %273 : vector<2x1xf32>
    %275 = arith.addf %271, %274 : vector<2x1xf32>
    %cst_63 = arith.constant 7.000000e+00 : f32
    %276 = vector.broadcast %cst_63 : f32 to vector<2x1xf32>
    %277 = arith.addf %228, %276 : vector<2x1xf32>
    %278 = math.log %277 : vector<2x1xf32>
    %279 = arith.addf %275, %278 : vector<2x1xf32>
    %cst_64 = arith.constant 8.000000e+00 : f32
    %280 = vector.broadcast %cst_64 : f32 to vector<2x1xf32>
    %281 = arith.addf %228, %280 : vector<2x1xf32>
    %cst_65 = arith.constant 1.000000e+00 : f32
    %282 = vector.broadcast %cst_65 : f32 to vector<2x1xf32>
    %283 = arith.divf %282, %281 : vector<2x1xf32>
    %284 = arith.mulf %283, %283 : vector<2x1xf32>
    %cst_66 = arith.constant 7.93650805E-4 : f32
    %285 = vector.broadcast %cst_66 : f32 to vector<2x1xf32>
    %286 = arith.mulf %284, %285 : vector<2x1xf32>
    %cst_67 = arith.constant -0.00277777785 : f32
    %287 = vector.broadcast %cst_67 : f32 to vector<2x1xf32>
    %288 = arith.addf %287, %286 : vector<2x1xf32>
    %289 = arith.mulf %284, %288 : vector<2x1xf32>
    %cst_68 = arith.constant 0.0833333358 : f32
    %290 = vector.broadcast %cst_68 : f32 to vector<2x1xf32>
    %291 = arith.addf %290, %289 : vector<2x1xf32>
    %292 = arith.mulf %283, %291 : vector<2x1xf32>
    %cst_69 = arith.constant 5.000000e-01 : f32
    %293 = vector.broadcast %cst_69 : f32 to vector<2x1xf32>
    %294 = arith.subf %281, %293 : vector<2x1xf32>
    %295 = math.log %281 : vector<2x1xf32>
    %296 = arith.mulf %294, %295 : vector<2x1xf32>
    %297 = arith.subf %296, %281 : vector<2x1xf32>
    %cst_70 = arith.constant 0.918938517 : f32
    %298 = vector.broadcast %cst_70 : f32 to vector<2x1xf32>
    %299 = arith.addf %297, %298 : vector<2x1xf32>
    %300 = arith.addf %299, %292 : vector<2x1xf32>
    %301 = arith.subf %300, %279 : vector<2x1xf32>
    %cst_71 = arith.constant 0.000000e+00 : f32
    %302 = vector.broadcast %cst_71 : f32 to vector<2x1xf32>
    %303 = arith.subf %302, %301 : vector<2x1xf32>
    %304 = math.log %230 : vector<2x1xf32>
    %305 = arith.mulf %228, %304 : vector<2x1xf32>
    %306 = arith.subf %303, %305 : vector<2x1xf32>
    %307 = math.log %232 : vector<2x1xf32>
    %cst_72 = arith.constant 1.000000e+00 : f32
    %308 = vector.broadcast %cst_72 : f32 to vector<2x1xf32>
    %309 = arith.addf %232, %308 : vector<2x1xf32>
    %310 = math.log %309 : vector<2x1xf32>
    %311 = arith.addf %307, %310 : vector<2x1xf32>
    %cst_73 = arith.constant 2.000000e+00 : f32
    %312 = vector.broadcast %cst_73 : f32 to vector<2x1xf32>
    %313 = arith.addf %232, %312 : vector<2x1xf32>
    %314 = math.log %313 : vector<2x1xf32>
    %315 = arith.addf %311, %314 : vector<2x1xf32>
    %cst_74 = arith.constant 3.000000e+00 : f32
    %316 = vector.broadcast %cst_74 : f32 to vector<2x1xf32>
    %317 = arith.addf %232, %316 : vector<2x1xf32>
    %318 = math.log %317 : vector<2x1xf32>
    %319 = arith.addf %315, %318 : vector<2x1xf32>
    %cst_75 = arith.constant 4.000000e+00 : f32
    %320 = vector.broadcast %cst_75 : f32 to vector<2x1xf32>
    %321 = arith.addf %232, %320 : vector<2x1xf32>
    %322 = math.log %321 : vector<2x1xf32>
    %323 = arith.addf %319, %322 : vector<2x1xf32>
    %cst_76 = arith.constant 5.000000e+00 : f32
    %324 = vector.broadcast %cst_76 : f32 to vector<2x1xf32>
    %325 = arith.addf %232, %324 : vector<2x1xf32>
    %326 = math.log %325 : vector<2x1xf32>
    %327 = arith.addf %323, %326 : vector<2x1xf32>
    %cst_77 = arith.constant 6.000000e+00 : f32
    %328 = vector.broadcast %cst_77 : f32 to vector<2x1xf32>
    %329 = arith.addf %232, %328 : vector<2x1xf32>
    %330 = math.log %329 : vector<2x1xf32>
    %331 = arith.addf %327, %330 : vector<2x1xf32>
    %cst_78 = arith.constant 7.000000e+00 : f32
    %332 = vector.broadcast %cst_78 : f32 to vector<2x1xf32>
    %333 = arith.addf %232, %332 : vector<2x1xf32>
    %334 = math.log %333 : vector<2x1xf32>
    %335 = arith.addf %331, %334 : vector<2x1xf32>
    %cst_79 = arith.constant 8.000000e+00 : f32
    %336 = vector.broadcast %cst_79 : f32 to vector<2x1xf32>
    %337 = arith.addf %232, %336 : vector<2x1xf32>
    %cst_80 = arith.constant 1.000000e+00 : f32
    %338 = vector.broadcast %cst_80 : f32 to vector<2x1xf32>
    %339 = arith.divf %338, %337 : vector<2x1xf32>
    %340 = arith.mulf %339, %339 : vector<2x1xf32>
    %cst_81 = arith.constant 7.93650805E-4 : f32
    %341 = vector.broadcast %cst_81 : f32 to vector<2x1xf32>
    %342 = arith.mulf %340, %341 : vector<2x1xf32>
    %cst_82 = arith.constant -0.00277777785 : f32
    %343 = vector.broadcast %cst_82 : f32 to vector<2x1xf32>
    %344 = arith.addf %343, %342 : vector<2x1xf32>
    %345 = arith.mulf %340, %344 : vector<2x1xf32>
    %cst_83 = arith.constant 0.0833333358 : f32
    %346 = vector.broadcast %cst_83 : f32 to vector<2x1xf32>
    %347 = arith.addf %346, %345 : vector<2x1xf32>
    %348 = arith.mulf %339, %347 : vector<2x1xf32>
    %cst_84 = arith.constant 5.000000e-01 : f32
    %349 = vector.broadcast %cst_84 : f32 to vector<2x1xf32>
    %350 = arith.subf %337, %349 : vector<2x1xf32>
    %351 = math.log %337 : vector<2x1xf32>
    %352 = arith.mulf %350, %351 : vector<2x1xf32>
    %353 = arith.subf %352, %337 : vector<2x1xf32>
    %cst_85 = arith.constant 0.918938517 : f32
    %354 = vector.broadcast %cst_85 : f32 to vector<2x1xf32>
    %355 = arith.addf %353, %354 : vector<2x1xf32>
    %356 = arith.addf %355, %348 : vector<2x1xf32>
    %357 = arith.subf %356, %335 : vector<2x1xf32>
    %cst_86 = arith.constant 0.000000e+00 : f32
    %358 = vector.broadcast %cst_86 : f32 to vector<2x1xf32>
    %359 = arith.subf %358, %357 : vector<2x1xf32>
    %360 = math.log %236 : vector<2x1xf32>
    %361 = arith.mulf %232, %360 : vector<2x1xf32>
    %362 = arith.subf %359, %361 : vector<2x1xf32>
    %cst_87 = arith.constant 1.000000e+00 : f32
    %363 = vector.broadcast %cst_87 : f32 to vector<2x1xf32>
    %364 = arith.subf %228, %363 : vector<2x1xf32>
    %365 = vector.broadcast %364 : vector<2x1xf32> to vector<2x256xf32>
    %366 = vector.broadcast %6 : vector<1x256xf32> to vector<2x256xf32>
    %367 = arith.mulf %365, %366 : vector<2x256xf32>
    %368 = vector.broadcast %306 : vector<2x1xf32> to vector<2x256xf32>
    %369 = arith.addf %368, %367 : vector<2x256xf32>
    %cst_88 = arith.constant 1.000000e+00 : f32
    %370 = vector.broadcast %cst_88 : f32 to vector<2x1xf32>
    %371 = arith.divf %370, %230 : vector<2x1xf32>
    %372 = vector.broadcast %5 : vector<1x256xf32> to vector<2x256xf32>
    %373 = vector.broadcast %371 : vector<2x1xf32> to vector<2x256xf32>
    %374 = arith.mulf %372, %373 : vector<2x256xf32>
    %375 = arith.subf %369, %374 : vector<2x256xf32>
    %cst_89 = arith.constant 1.000000e+00 : f32
    %376 = vector.broadcast %cst_89 : f32 to vector<2x1xf32>
    %377 = arith.subf %232, %376 : vector<2x1xf32>
    %378 = vector.broadcast %377 : vector<2x1xf32> to vector<2x256xf32>
    %379 = vector.broadcast %6 : vector<1x256xf32> to vector<2x256xf32>
    %380 = arith.mulf %378, %379 : vector<2x256xf32>
    %381 = vector.broadcast %362 : vector<2x1xf32> to vector<2x256xf32>
    %382 = arith.addf %381, %380 : vector<2x256xf32>
    %cst_90 = arith.constant 1.000000e+00 : f32
    %383 = vector.broadcast %cst_90 : f32 to vector<2x1xf32>
    %384 = arith.divf %383, %236 : vector<2x1xf32>
    %385 = vector.broadcast %5 : vector<1x256xf32> to vector<2x256xf32>
    %386 = vector.broadcast %384 : vector<2x1xf32> to vector<2x256xf32>
    %387 = arith.mulf %385, %386 : vector<2x256xf32>
    %388 = arith.subf %382, %387 : vector<2x256xf32>
    %389 = arith.maximumf %375, %388 : vector<2x256xf32>
    %390 = arith.subf %375, %389 : vector<2x256xf32>
    %391 = math.exp %390 : vector<2x256xf32>
    %392 = vector.broadcast %249 : vector<2x1xf32> to vector<2x256xf32>
    %393 = arith.mulf %392, %391 : vector<2x256xf32>
    %394 = arith.subf %388, %389 : vector<2x256xf32>
    %395 = math.exp %394 : vector<2x256xf32>
    %396 = vector.broadcast %250 : vector<2x1xf32> to vector<2x256xf32>
    %397 = arith.mulf %396, %395 : vector<2x256xf32>
    %398 = arith.addf %393, %397 : vector<2x256xf32>
    %399 = math.log %398 : vector<2x256xf32>
    %400 = arith.addf %389, %399 : vector<2x256xf32>
    %401 = vector.extract_strided_slice %226 {offsets = [0, 6], sizes = [2, 1], strides = [1, 1]} : vector<2x128xf32> to vector<2x1xf32>
    %402 = arith.addf %401, %1 : vector<2x1xf32>
    %403 = vector.extract_strided_slice %226 {offsets = [0, 7], sizes = [2, 1], strides = [1, 1]} : vector<2x128xf32> to vector<2x1xf32>
    %404 = math.exp %403 : vector<2x1xf32>
    %405 = vector.extract_strided_slice %226 {offsets = [0, 9], sizes = [2, 1], strides = [1, 1]} : vector<2x128xf32> to vector<2x1xf32>
    %406 = arith.addf %405, %1 : vector<2x1xf32>
    %407 = vector.extract_strided_slice %226 {offsets = [0, 10], sizes = [2, 1], strides = [1, 1]} : vector<2x128xf32> to vector<2x1xf32>
    %408 = math.exp %407 : vector<2x1xf32>
    %409 = vector.extract_strided_slice %226 {offsets = [0, 8], sizes = [2, 1], strides = [1, 1]} : vector<2x128xf32> to vector<2x1xf32>
    %410 = math.exp %409 : vector<2x1xf32>
    %411 = vector.extract_strided_slice %226 {offsets = [0, 11], sizes = [2, 1], strides = [1, 1]} : vector<2x128xf32> to vector<2x1xf32>
    %412 = math.exp %411 : vector<2x1xf32>
    %413 = arith.maximumf %410, %412 : vector<2x1xf32>
    %414 = arith.subf %410, %413 : vector<2x1xf32>
    %415 = math.exp %414 : vector<2x1xf32>
    %416 = arith.subf %412, %413 : vector<2x1xf32>
    %417 = math.exp %416 : vector<2x1xf32>
    %418 = arith.addf %415, %417 : vector<2x1xf32>
    %cst_91 = arith.constant 1.000000e+00 : f32
    %419 = vector.broadcast %cst_91 : f32 to vector<2x1xf32>
    %420 = arith.divf %419, %418 : vector<2x1xf32>
    %421 = arith.mulf %415, %420 : vector<2x1xf32>
    %422 = arith.mulf %417, %420 : vector<2x1xf32>
    %cst_92 = arith.constant 3.750000e+00 : f32
    %423 = vector.broadcast %cst_92 : f32 to vector<2x1xf32>
    %424 = arith.minimumf %404, %423 : vector<2x1xf32>
    %cst_93 = arith.constant 0.266666681 : f32
    %425 = vector.broadcast %cst_93 : f32 to vector<2x1xf32>
    %426 = arith.mulf %424, %425 : vector<2x1xf32>
    %427 = arith.mulf %426, %426 : vector<2x1xf32>
    %cst_94 = arith.constant 4.581300e-03 : f32
    %428 = vector.broadcast %cst_94 : f32 to vector<2x1xf32>
    %429 = arith.mulf %427, %428 : vector<2x1xf32>
    %cst_95 = arith.constant 3.607680e-02 : f32
    %430 = vector.broadcast %cst_95 : f32 to vector<2x1xf32>
    %431 = arith.addf %430, %429 : vector<2x1xf32>
    %432 = arith.mulf %427, %431 : vector<2x1xf32>
    %cst_96 = arith.constant 0.26597321 : f32
    %433 = vector.broadcast %cst_96 : f32 to vector<2x1xf32>
    %434 = arith.addf %433, %432 : vector<2x1xf32>
    %435 = arith.mulf %427, %434 : vector<2x1xf32>
    %cst_97 = arith.constant 1.2067492 : f32
    %436 = vector.broadcast %cst_97 : f32 to vector<2x1xf32>
    %437 = arith.addf %436, %435 : vector<2x1xf32>
    %438 = arith.mulf %427, %437 : vector<2x1xf32>
    %cst_98 = arith.constant 3.08994246 : f32
    %439 = vector.broadcast %cst_98 : f32 to vector<2x1xf32>
    %440 = arith.addf %439, %438 : vector<2x1xf32>
    %441 = arith.mulf %427, %440 : vector<2x1xf32>
    %cst_99 = arith.constant 3.51562285 : f32
    %442 = vector.broadcast %cst_99 : f32 to vector<2x1xf32>
    %443 = arith.addf %442, %441 : vector<2x1xf32>
    %444 = arith.mulf %427, %443 : vector<2x1xf32>
    %cst_100 = arith.constant 1.000000e+00 : f32
    %445 = vector.broadcast %cst_100 : f32 to vector<2x1xf32>
    %446 = arith.addf %445, %444 : vector<2x1xf32>
    %447 = math.log %446 : vector<2x1xf32>
    %cst_101 = arith.constant 3.750000e+00 : f32
    %448 = vector.broadcast %cst_101 : f32 to vector<2x1xf32>
    %449 = arith.maximumf %404, %448 : vector<2x1xf32>
    %cst_102 = arith.constant 3.750000e+00 : f32
    %450 = vector.broadcast %cst_102 : f32 to vector<2x1xf32>
    %451 = arith.divf %450, %449 : vector<2x1xf32>
    %cst_103 = arith.constant 3.923770e-03 : f32
    %452 = vector.broadcast %cst_103 : f32 to vector<2x1xf32>
    %453 = arith.mulf %451, %452 : vector<2x1xf32>
    %cst_104 = arith.constant -0.0164763294 : f32
    %454 = vector.broadcast %cst_104 : f32 to vector<2x1xf32>
    %455 = arith.addf %454, %453 : vector<2x1xf32>
    %456 = arith.mulf %451, %455 : vector<2x1xf32>
    %cst_105 = arith.constant 0.0263553709 : f32
    %457 = vector.broadcast %cst_105 : f32 to vector<2x1xf32>
    %458 = arith.addf %457, %456 : vector<2x1xf32>
    %459 = arith.mulf %451, %458 : vector<2x1xf32>
    %cst_106 = arith.constant -0.0205770601 : f32
    %460 = vector.broadcast %cst_106 : f32 to vector<2x1xf32>
    %461 = arith.addf %460, %459 : vector<2x1xf32>
    %462 = arith.mulf %451, %461 : vector<2x1xf32>
    %cst_107 = arith.constant 0.00916280969 : f32
    %463 = vector.broadcast %cst_107 : f32 to vector<2x1xf32>
    %464 = arith.addf %463, %462 : vector<2x1xf32>
    %465 = arith.mulf %451, %464 : vector<2x1xf32>
    %cst_108 = arith.constant -1.575650e-03 : f32
    %466 = vector.broadcast %cst_108 : f32 to vector<2x1xf32>
    %467 = arith.addf %466, %465 : vector<2x1xf32>
    %468 = arith.mulf %451, %467 : vector<2x1xf32>
    %cst_109 = arith.constant 2.253190e-03 : f32
    %469 = vector.broadcast %cst_109 : f32 to vector<2x1xf32>
    %470 = arith.addf %469, %468 : vector<2x1xf32>
    %471 = arith.mulf %451, %470 : vector<2x1xf32>
    %cst_110 = arith.constant 0.01328592 : f32
    %472 = vector.broadcast %cst_110 : f32 to vector<2x1xf32>
    %473 = arith.addf %472, %471 : vector<2x1xf32>
    %474 = arith.mulf %451, %473 : vector<2x1xf32>
    %cst_111 = arith.constant 0.398942292 : f32
    %475 = vector.broadcast %cst_111 : f32 to vector<2x1xf32>
    %476 = arith.addf %475, %474 : vector<2x1xf32>
    %477 = math.log %449 : vector<2x1xf32>
    %cst_112 = arith.constant 5.000000e-01 : f32
    %478 = vector.broadcast %cst_112 : f32 to vector<2x1xf32>
    %479 = arith.mulf %478, %477 : vector<2x1xf32>
    %480 = arith.subf %449, %479 : vector<2x1xf32>
    %481 = math.log %476 : vector<2x1xf32>
    %482 = arith.addf %480, %481 : vector<2x1xf32>
    %cst_113 = arith.constant 3.750000e+00 : f32
    %483 = vector.broadcast %cst_113 : f32 to vector<2x1xf32>
    %484 = arith.cmpf ole, %404, %483 : vector<2x1xf32>
    %485 = arith.select %484, %447, %482 : vector<2x1xi1>, vector<2x1xf32>
    %cst_114 = arith.constant 1.83787704 : f32
    %486 = vector.broadcast %cst_114 : f32 to vector<2x1xf32>
    %487 = arith.addf %486, %485 : vector<2x1xf32>
    %cst_115 = arith.constant 0.000000e+00 : f32
    %488 = vector.broadcast %cst_115 : f32 to vector<2x1xf32>
    %489 = arith.subf %488, %487 : vector<2x1xf32>
    %cst_116 = arith.constant 3.750000e+00 : f32
    %490 = vector.broadcast %cst_116 : f32 to vector<2x1xf32>
    %491 = arith.minimumf %408, %490 : vector<2x1xf32>
    %cst_117 = arith.constant 0.266666681 : f32
    %492 = vector.broadcast %cst_117 : f32 to vector<2x1xf32>
    %493 = arith.mulf %491, %492 : vector<2x1xf32>
    %494 = arith.mulf %493, %493 : vector<2x1xf32>
    %cst_118 = arith.constant 4.581300e-03 : f32
    %495 = vector.broadcast %cst_118 : f32 to vector<2x1xf32>
    %496 = arith.mulf %494, %495 : vector<2x1xf32>
    %cst_119 = arith.constant 3.607680e-02 : f32
    %497 = vector.broadcast %cst_119 : f32 to vector<2x1xf32>
    %498 = arith.addf %497, %496 : vector<2x1xf32>
    %499 = arith.mulf %494, %498 : vector<2x1xf32>
    %cst_120 = arith.constant 0.26597321 : f32
    %500 = vector.broadcast %cst_120 : f32 to vector<2x1xf32>
    %501 = arith.addf %500, %499 : vector<2x1xf32>
    %502 = arith.mulf %494, %501 : vector<2x1xf32>
    %cst_121 = arith.constant 1.2067492 : f32
    %503 = vector.broadcast %cst_121 : f32 to vector<2x1xf32>
    %504 = arith.addf %503, %502 : vector<2x1xf32>
    %505 = arith.mulf %494, %504 : vector<2x1xf32>
    %cst_122 = arith.constant 3.08994246 : f32
    %506 = vector.broadcast %cst_122 : f32 to vector<2x1xf32>
    %507 = arith.addf %506, %505 : vector<2x1xf32>
    %508 = arith.mulf %494, %507 : vector<2x1xf32>
    %cst_123 = arith.constant 3.51562285 : f32
    %509 = vector.broadcast %cst_123 : f32 to vector<2x1xf32>
    %510 = arith.addf %509, %508 : vector<2x1xf32>
    %511 = arith.mulf %494, %510 : vector<2x1xf32>
    %cst_124 = arith.constant 1.000000e+00 : f32
    %512 = vector.broadcast %cst_124 : f32 to vector<2x1xf32>
    %513 = arith.addf %512, %511 : vector<2x1xf32>
    %514 = math.log %513 : vector<2x1xf32>
    %cst_125 = arith.constant 3.750000e+00 : f32
    %515 = vector.broadcast %cst_125 : f32 to vector<2x1xf32>
    %516 = arith.maximumf %408, %515 : vector<2x1xf32>
    %cst_126 = arith.constant 3.750000e+00 : f32
    %517 = vector.broadcast %cst_126 : f32 to vector<2x1xf32>
    %518 = arith.divf %517, %516 : vector<2x1xf32>
    %cst_127 = arith.constant 3.923770e-03 : f32
    %519 = vector.broadcast %cst_127 : f32 to vector<2x1xf32>
    %520 = arith.mulf %518, %519 : vector<2x1xf32>
    %cst_128 = arith.constant -0.0164763294 : f32
    %521 = vector.broadcast %cst_128 : f32 to vector<2x1xf32>
    %522 = arith.addf %521, %520 : vector<2x1xf32>
    %523 = arith.mulf %518, %522 : vector<2x1xf32>
    %cst_129 = arith.constant 0.0263553709 : f32
    %524 = vector.broadcast %cst_129 : f32 to vector<2x1xf32>
    %525 = arith.addf %524, %523 : vector<2x1xf32>
    %526 = arith.mulf %518, %525 : vector<2x1xf32>
    %cst_130 = arith.constant -0.0205770601 : f32
    %527 = vector.broadcast %cst_130 : f32 to vector<2x1xf32>
    %528 = arith.addf %527, %526 : vector<2x1xf32>
    %529 = arith.mulf %518, %528 : vector<2x1xf32>
    %cst_131 = arith.constant 0.00916280969 : f32
    %530 = vector.broadcast %cst_131 : f32 to vector<2x1xf32>
    %531 = arith.addf %530, %529 : vector<2x1xf32>
    %532 = arith.mulf %518, %531 : vector<2x1xf32>
    %cst_132 = arith.constant -1.575650e-03 : f32
    %533 = vector.broadcast %cst_132 : f32 to vector<2x1xf32>
    %534 = arith.addf %533, %532 : vector<2x1xf32>
    %535 = arith.mulf %518, %534 : vector<2x1xf32>
    %cst_133 = arith.constant 2.253190e-03 : f32
    %536 = vector.broadcast %cst_133 : f32 to vector<2x1xf32>
    %537 = arith.addf %536, %535 : vector<2x1xf32>
    %538 = arith.mulf %518, %537 : vector<2x1xf32>
    %cst_134 = arith.constant 0.01328592 : f32
    %539 = vector.broadcast %cst_134 : f32 to vector<2x1xf32>
    %540 = arith.addf %539, %538 : vector<2x1xf32>
    %541 = arith.mulf %518, %540 : vector<2x1xf32>
    %cst_135 = arith.constant 0.398942292 : f32
    %542 = vector.broadcast %cst_135 : f32 to vector<2x1xf32>
    %543 = arith.addf %542, %541 : vector<2x1xf32>
    %544 = math.log %516 : vector<2x1xf32>
    %cst_136 = arith.constant 5.000000e-01 : f32
    %545 = vector.broadcast %cst_136 : f32 to vector<2x1xf32>
    %546 = arith.mulf %545, %544 : vector<2x1xf32>
    %547 = arith.subf %516, %546 : vector<2x1xf32>
    %548 = math.log %543 : vector<2x1xf32>
    %549 = arith.addf %547, %548 : vector<2x1xf32>
    %cst_137 = arith.constant 3.750000e+00 : f32
    %550 = vector.broadcast %cst_137 : f32 to vector<2x1xf32>
    %551 = arith.cmpf ole, %408, %550 : vector<2x1xf32>
    %552 = arith.select %551, %514, %549 : vector<2x1xi1>, vector<2x1xf32>
    %cst_138 = arith.constant 1.83787704 : f32
    %553 = vector.broadcast %cst_138 : f32 to vector<2x1xf32>
    %554 = arith.addf %553, %552 : vector<2x1xf32>
    %cst_139 = arith.constant 0.000000e+00 : f32
    %555 = vector.broadcast %cst_139 : f32 to vector<2x1xf32>
    %556 = arith.subf %555, %554 : vector<2x1xf32>
    %cst_140 = arith.constant 0.159154937 : f32
    %557 = vector.broadcast %cst_140 : f32 to vector<2x1xf32>
    %558 = arith.mulf %402, %557 : vector<2x1xf32>
    %cst_141 = arith.constant 5.000000e-01 : f32
    %559 = vector.broadcast %cst_141 : f32 to vector<2x1xf32>
    %560 = arith.addf %558, %559 : vector<2x1xf32>
    %561 = math.floor %560 : vector<2x1xf32>
    %cst_142 = arith.constant 6.28318548 : f32
    %562 = vector.broadcast %cst_142 : f32 to vector<2x1xf32>
    %563 = arith.mulf %561, %562 : vector<2x1xf32>
    %564 = arith.subf %402, %563 : vector<2x1xf32>
    %565 = arith.mulf %564, %564 : vector<2x1xf32>
    %cst_143 = arith.constant 1.60590444E-10 : f32
    %566 = vector.broadcast %cst_143 : f32 to vector<2x1xf32>
    %567 = arith.mulf %565, %566 : vector<2x1xf32>
    %cst_144 = arith.constant -2.50521079E-8 : f32
    %568 = vector.broadcast %cst_144 : f32 to vector<2x1xf32>
    %569 = arith.addf %568, %567 : vector<2x1xf32>
    %570 = arith.mulf %565, %569 : vector<2x1xf32>
    %cst_145 = arith.constant 2.75573188E-6 : f32
    %571 = vector.broadcast %cst_145 : f32 to vector<2x1xf32>
    %572 = arith.addf %571, %570 : vector<2x1xf32>
    %573 = arith.mulf %565, %572 : vector<2x1xf32>
    %cst_146 = arith.constant -1.98412701E-4 : f32
    %574 = vector.broadcast %cst_146 : f32 to vector<2x1xf32>
    %575 = arith.addf %574, %573 : vector<2x1xf32>
    %576 = arith.mulf %565, %575 : vector<2x1xf32>
    %cst_147 = arith.constant 0.00833333377 : f32
    %577 = vector.broadcast %cst_147 : f32 to vector<2x1xf32>
    %578 = arith.addf %577, %576 : vector<2x1xf32>
    %579 = arith.mulf %565, %578 : vector<2x1xf32>
    %cst_148 = arith.constant -0.166666672 : f32
    %580 = vector.broadcast %cst_148 : f32 to vector<2x1xf32>
    %581 = arith.addf %580, %579 : vector<2x1xf32>
    %582 = arith.mulf %565, %581 : vector<2x1xf32>
    %cst_149 = arith.constant 1.000000e+00 : f32
    %583 = vector.broadcast %cst_149 : f32 to vector<2x1xf32>
    %584 = arith.addf %583, %582 : vector<2x1xf32>
    %585 = arith.mulf %564, %584 : vector<2x1xf32>
    %cst_150 = arith.constant -1.14707454E-11 : f32
    %586 = vector.broadcast %cst_150 : f32 to vector<2x1xf32>
    %587 = arith.mulf %565, %586 : vector<2x1xf32>
    %cst_151 = arith.constant 2.08767559E-9 : f32
    %588 = vector.broadcast %cst_151 : f32 to vector<2x1xf32>
    %589 = arith.addf %588, %587 : vector<2x1xf32>
    %590 = arith.mulf %565, %589 : vector<2x1xf32>
    %cst_152 = arith.constant -2.755732E-7 : f32
    %591 = vector.broadcast %cst_152 : f32 to vector<2x1xf32>
    %592 = arith.addf %591, %590 : vector<2x1xf32>
    %593 = arith.mulf %565, %592 : vector<2x1xf32>
    %cst_153 = arith.constant 2.48015876E-5 : f32
    %594 = vector.broadcast %cst_153 : f32 to vector<2x1xf32>
    %595 = arith.addf %594, %593 : vector<2x1xf32>
    %596 = arith.mulf %565, %595 : vector<2x1xf32>
    %cst_154 = arith.constant -0.00138888892 : f32
    %597 = vector.broadcast %cst_154 : f32 to vector<2x1xf32>
    %598 = arith.addf %597, %596 : vector<2x1xf32>
    %599 = arith.mulf %565, %598 : vector<2x1xf32>
    %cst_155 = arith.constant 0.0416666679 : f32
    %600 = vector.broadcast %cst_155 : f32 to vector<2x1xf32>
    %601 = arith.addf %600, %599 : vector<2x1xf32>
    %602 = arith.mulf %565, %601 : vector<2x1xf32>
    %cst_156 = arith.constant -5.000000e-01 : f32
    %603 = vector.broadcast %cst_156 : f32 to vector<2x1xf32>
    %604 = arith.addf %603, %602 : vector<2x1xf32>
    %605 = arith.mulf %565, %604 : vector<2x1xf32>
    %cst_157 = arith.constant 1.000000e+00 : f32
    %606 = vector.broadcast %cst_157 : f32 to vector<2x1xf32>
    %607 = arith.addf %606, %605 : vector<2x1xf32>
    %cst_158 = arith.constant 0.159154937 : f32
    %608 = vector.broadcast %cst_158 : f32 to vector<2x1xf32>
    %609 = arith.mulf %406, %608 : vector<2x1xf32>
    %cst_159 = arith.constant 5.000000e-01 : f32
    %610 = vector.broadcast %cst_159 : f32 to vector<2x1xf32>
    %611 = arith.addf %609, %610 : vector<2x1xf32>
    %612 = math.floor %611 : vector<2x1xf32>
    %cst_160 = arith.constant 6.28318548 : f32
    %613 = vector.broadcast %cst_160 : f32 to vector<2x1xf32>
    %614 = arith.mulf %612, %613 : vector<2x1xf32>
    %615 = arith.subf %406, %614 : vector<2x1xf32>
    %616 = arith.mulf %615, %615 : vector<2x1xf32>
    %cst_161 = arith.constant 1.60590444E-10 : f32
    %617 = vector.broadcast %cst_161 : f32 to vector<2x1xf32>
    %618 = arith.mulf %616, %617 : vector<2x1xf32>
    %cst_162 = arith.constant -2.50521079E-8 : f32
    %619 = vector.broadcast %cst_162 : f32 to vector<2x1xf32>
    %620 = arith.addf %619, %618 : vector<2x1xf32>
    %621 = arith.mulf %616, %620 : vector<2x1xf32>
    %cst_163 = arith.constant 2.75573188E-6 : f32
    %622 = vector.broadcast %cst_163 : f32 to vector<2x1xf32>
    %623 = arith.addf %622, %621 : vector<2x1xf32>
    %624 = arith.mulf %616, %623 : vector<2x1xf32>
    %cst_164 = arith.constant -1.98412701E-4 : f32
    %625 = vector.broadcast %cst_164 : f32 to vector<2x1xf32>
    %626 = arith.addf %625, %624 : vector<2x1xf32>
    %627 = arith.mulf %616, %626 : vector<2x1xf32>
    %cst_165 = arith.constant 0.00833333377 : f32
    %628 = vector.broadcast %cst_165 : f32 to vector<2x1xf32>
    %629 = arith.addf %628, %627 : vector<2x1xf32>
    %630 = arith.mulf %616, %629 : vector<2x1xf32>
    %cst_166 = arith.constant -0.166666672 : f32
    %631 = vector.broadcast %cst_166 : f32 to vector<2x1xf32>
    %632 = arith.addf %631, %630 : vector<2x1xf32>
    %633 = arith.mulf %616, %632 : vector<2x1xf32>
    %cst_167 = arith.constant 1.000000e+00 : f32
    %634 = vector.broadcast %cst_167 : f32 to vector<2x1xf32>
    %635 = arith.addf %634, %633 : vector<2x1xf32>
    %636 = arith.mulf %615, %635 : vector<2x1xf32>
    %cst_168 = arith.constant -1.14707454E-11 : f32
    %637 = vector.broadcast %cst_168 : f32 to vector<2x1xf32>
    %638 = arith.mulf %616, %637 : vector<2x1xf32>
    %cst_169 = arith.constant 2.08767559E-9 : f32
    %639 = vector.broadcast %cst_169 : f32 to vector<2x1xf32>
    %640 = arith.addf %639, %638 : vector<2x1xf32>
    %641 = arith.mulf %616, %640 : vector<2x1xf32>
    %cst_170 = arith.constant -2.755732E-7 : f32
    %642 = vector.broadcast %cst_170 : f32 to vector<2x1xf32>
    %643 = arith.addf %642, %641 : vector<2x1xf32>
    %644 = arith.mulf %616, %643 : vector<2x1xf32>
    %cst_171 = arith.constant 2.48015876E-5 : f32
    %645 = vector.broadcast %cst_171 : f32 to vector<2x1xf32>
    %646 = arith.addf %645, %644 : vector<2x1xf32>
    %647 = arith.mulf %616, %646 : vector<2x1xf32>
    %cst_172 = arith.constant -0.00138888892 : f32
    %648 = vector.broadcast %cst_172 : f32 to vector<2x1xf32>
    %649 = arith.addf %648, %647 : vector<2x1xf32>
    %650 = arith.mulf %616, %649 : vector<2x1xf32>
    %cst_173 = arith.constant 0.0416666679 : f32
    %651 = vector.broadcast %cst_173 : f32 to vector<2x1xf32>
    %652 = arith.addf %651, %650 : vector<2x1xf32>
    %653 = arith.mulf %616, %652 : vector<2x1xf32>
    %cst_174 = arith.constant -5.000000e-01 : f32
    %654 = vector.broadcast %cst_174 : f32 to vector<2x1xf32>
    %655 = arith.addf %654, %653 : vector<2x1xf32>
    %656 = arith.mulf %616, %655 : vector<2x1xf32>
    %cst_175 = arith.constant 1.000000e+00 : f32
    %657 = vector.broadcast %cst_175 : f32 to vector<2x1xf32>
    %658 = arith.addf %657, %656 : vector<2x1xf32>
    %659 = vector.broadcast %7 : vector<1x256xf32> to vector<2x256xf32>
    %660 = vector.broadcast %607 : vector<2x1xf32> to vector<2x256xf32>
    %661 = arith.mulf %659, %660 : vector<2x256xf32>
    %662 = vector.broadcast %8 : vector<1x256xf32> to vector<2x256xf32>
    %663 = vector.broadcast %585 : vector<2x1xf32> to vector<2x256xf32>
    %664 = arith.mulf %662, %663 : vector<2x256xf32>
    %665 = arith.addf %661, %664 : vector<2x256xf32>
    %666 = vector.broadcast %404 : vector<2x1xf32> to vector<2x256xf32>
    %667 = arith.mulf %666, %665 : vector<2x256xf32>
    %668 = vector.broadcast %489 : vector<2x1xf32> to vector<2x256xf32>
    %669 = arith.addf %667, %668 : vector<2x256xf32>
    %670 = vector.broadcast %7 : vector<1x256xf32> to vector<2x256xf32>
    %671 = vector.broadcast %658 : vector<2x1xf32> to vector<2x256xf32>
    %672 = arith.mulf %670, %671 : vector<2x256xf32>
    %673 = vector.broadcast %8 : vector<1x256xf32> to vector<2x256xf32>
    %674 = vector.broadcast %636 : vector<2x1xf32> to vector<2x256xf32>
    %675 = arith.mulf %673, %674 : vector<2x256xf32>
    %676 = arith.addf %672, %675 : vector<2x256xf32>
    %677 = vector.broadcast %408 : vector<2x1xf32> to vector<2x256xf32>
    %678 = arith.mulf %677, %676 : vector<2x256xf32>
    %679 = vector.broadcast %556 : vector<2x1xf32> to vector<2x256xf32>
    %680 = arith.addf %678, %679 : vector<2x256xf32>
    %681 = arith.maximumf %669, %680 : vector<2x256xf32>
    %682 = arith.subf %669, %681 : vector<2x256xf32>
    %683 = math.exp %682 : vector<2x256xf32>
    %684 = vector.broadcast %421 : vector<2x1xf32> to vector<2x256xf32>
    %685 = arith.mulf %684, %683 : vector<2x256xf32>
    %686 = arith.subf %680, %681 : vector<2x256xf32>
    %687 = math.exp %686 : vector<2x256xf32>
    %688 = vector.broadcast %422 : vector<2x1xf32> to vector<2x256xf32>
    %689 = arith.mulf %688, %687 : vector<2x256xf32>
    %690 = arith.addf %685, %689 : vector<2x256xf32>
    %691 = math.log %690 : vector<2x256xf32>
    %692 = arith.addf %681, %691 : vector<2x256xf32>
    %693 = arith.addf %400, %692 : vector<2x256xf32>
    %cst_176 = arith.constant dense<0xFF800000> : vector<2xf32>
    %694 = vector.multi_reduction <maximumf>, %693, %cst_176 [1] : vector<2x256xf32> to vector<2xf32>
    %695 = vector.shape_cast %694 : vector<2xf32> to vector<2x1xf32>
    %696 = vector.broadcast %695 : vector<2x1xf32> to vector<2x256xf32>
    %697 = arith.subf %693, %696 : vector<2x256xf32>
    %698 = math.exp %697 : vector<2x256xf32>
    %cst_177 = arith.constant dense<0.000000e+00> : vector<2xf32>
    %699 = vector.multi_reduction <add>, %698, %cst_177 [1] : vector<2x256xf32> to vector<2xf32>
    %700 = vector.shape_cast %699 : vector<2xf32> to vector<2x1xf32>
    %701 = math.log %700 : vector<2x1xf32>
    %702 = arith.addf %695, %701 : vector<2x1xf32>
    %703 = vector.broadcast %702 : vector<2x1xf32> to vector<2x256xf32>
    %704 = arith.subf %693, %703 : vector<2x256xf32>
    %c0_178 = arith.constant 0 : index
    %c0_179 = arith.constant 0 : index
    %705 = vector.load %arg4[%c0_178, %c0_179] : memref<4x256xf32, #tpu.memory_space<vmem>>, vector<2x256xf32>
    tpu.vector_store %arg4[%c0_178, %c0_179], %146 {strides = array<i32>} : memref<4x256xf32, #tpu.memory_space<vmem>>, vector<2x256xf32>,
    %c2 = arith.constant 2 : index
    %c0_180 = arith.constant 0 : index
    %706 = vector.load %arg4[%c2, %c0_180] : memref<4x256xf32, #tpu.memory_space<vmem>>, vector<2x256xf32>
    tpu.vector_store %arg4[%c2, %c0_180], %704 {strides = array<i32>} : memref<4x256xf32, #tpu.memory_space<vmem>>, vector<2x256xf32>,
    return
  }
}

</mosaic_0001>

<llo_original>
// kernel: conv_joint_model_forward.1
$region0: #{conv_joint_model_forward.1}
  #allocation0 [shape = 'u32[]', space=smem, size = 0x4, offset = 0x4, fixed_abs, tag = 'smem constant byte address 0x4 - core index']
  #allocation1 [shape = 'u32[144,128]{1,0:T(1,128)}', space=vmem, size = 0x12000, scoped, tag = 'internal scratch']
  %s0 = inlined_call_operand.vmem [shape: f32[8,256], index: 0, kind: input, shape index: {}]
  %s1 = inlined_call_operand.vmem [shape: f32[2,1], index: 1, kind: input, shape index: {}]
  %s2 = inlined_call_operand.vmem [shape: f32[24,256], index: 2, kind: input, shape index: {}]
  %s3 = inlined_call_operand.hbm [shape: f32[685,128], index: 3, kind: input, shape index: {}]
  %s4 = inlined_call_operand.vmem [shape: f32[4,256], index: 4, kind: output, shape index: {}]
  %s5 = sld [smem:[#allocation0]]
  $region30: #{conv_joint_model_forward.1} parent=0
    _
  %s7 = ssub.s32 1, %s5
  %s8 = scalar_select 0, %s7, %s5
  $region1: #{conv_joint_model_forward.1} parent=0
    #allocation2 [shape = 'u8[352256]{0}', space=vmem, size = 0x56000, scoped, tag = 'input window, operand 3, single buffered']
    #allocation3 [shape = 's32[1]{0}', space=sflag, size = 0x4, scoped, tag = 'scoped memory for conv_joint_model_forward.1']
    %9 = vsyncpa [#allocation3], 0
    // Predicated region
    $region2: #{conv_joint_model_forward.1} parent=1 // pred_check
      _
    $region3: #{conv_joint_model_forward.1} parent=1 // pred_check_branch
      %11 = sbr.rel (0) target = $region5
    $region4: #{conv_joint_model_forward.1} parent=1 // pred_region
      _
    $region5: #{conv_joint_model_forward.1} parent=1 // pred_fallthru
      _
    // Predicated region
    $region6: #{conv_joint_model_forward.1} parent=1 // pred_check
      _
    $region7: #{conv_joint_model_forward.1} parent=1 // pred_check_branch
      %13 = sbr.rel (0) target = $region9
    $region8: #{conv_joint_model_forward.1} parent=1 // pred_region
      _
    $region9: #{conv_joint_model_forward.1} parent=1 // pred_fallthru
      _
    // Predicated region
    $region10: #{conv_joint_model_forward.1} parent=1 // pred_check
      _
    $region11: #{conv_joint_model_forward.1} parent=1 // pred_check_branch
      %15 = sbr.rel (0) target = $region13
    $region12: #{conv_joint_model_forward.1} parent=1 // pred_region
      _
    $region13: #{conv_joint_model_forward.1} parent=1 // pred_fallthru
      _
    // Predicated region
    $region14: #{conv_joint_model_forward.1} parent=1 // pred_check
      _
    $region15: #{conv_joint_model_forward.1} parent=1 // pred_check_branch
      %17 = sbr.rel (0) target = $region17
    $region16: #{conv_joint_model_forward.1} parent=1 // pred_region
      %s19 = ssub.s32 11008, 11008
      %20 = vsyncadd [#allocation3], %s19
      %s21 = sshll.u32 [#allocation2], 4
      %s22 = int_to_ptr.vmem [resolvable:$true] %s21
      %27 = dma.hbm_to_vmem [thread:$0]  %s3, 11008, %s22, [#allocation3], 128, 128, 8
    $region17: #{conv_joint_model_forward.1} parent=1 // pred_fallthru
      _
    // Predicated region
    $region18: #{conv_joint_model_forward.1} parent=1 // pred_check
      _
    $region19: #{conv_joint_model_forward.1} parent=1 // pred_check_branch
      %29 = sbr.rel (0) target = $region21
    $region20: #{conv_joint_model_forward.1} parent=1 // pred_region
      %30 = dma.done [#allocation3], 11008
    $region21: #{conv_joint_model_forward.1} parent=1 // pred_fallthru
      _
    %v32 = vld [vmem:[%s0] sm:$0xff]
    %v33 = vld [vmem:[%s0 + $0x8] sm:$0xff]
    %v34 = vld [vmem:[%s1] sm:$0x3]
    %v35 = vld [vmem:[%s2] sm:$0xff]
    %v36 = vld [vmem:[%s2 + $0x8] sm:$0xff]
    %v37 = vld [vmem:[%s2 + $0x10] sm:$0xff]
    %v38 = vld [vmem:[%s2 + $0x18] sm:$0xff]
    %v39 = vld [vmem:[%s2 + $0x20] sm:$0xff]
    %v40 = vld [vmem:[%s2 + $0x28] sm:$0xff]
    %41 = vrot.lane.b32.xlu0 %v32, 17
    %v42 = vpop.permute.xlu0 %41
    %43 = vrot.lane.b32.xlu0 %v33, 17
    %v44 = vpop.permute.xlu0 %43
    %v45 = vlaneseq
    %v46 = vand.u32 %v45, 127
    %vm47 = vcmp.lt.s32.totalorder %v46, 17
    %v48 = vsel %vm47, %v42, %v44
    %v49 = vsel %vm47, %v44, %v42
    %v50 = vlaneseq
    %v51 = vshrl.u32 %v50, 7
    %v52 = vsub.s32 0, %v51
    %v53 = vrot.slane %v35, %v52
    %v54 = vlaneseq
    %v55 = vshrl.u32 %v54, 7
    %v56 = vsub.s32 0, %v55
    %v57 = vrot.slane %v36, %v56
    %v58 = vmul.f32 %v49, %v53
    %v59 = vmul.f32 %v48, %v57
    %60 = vrot.lane.b32.xlu0 %v32, 16
    %v61 = vpop.permute.xlu0 %60
    %62 = vrot.lane.b32.xlu0 %v33, 16
    %v63 = vpop.permute.xlu0 %62
    %vm64 = vcmp.lt.s32.totalorder %v46, 16
    %v65 = vsel %vm64, %v61, %v63
    %v66 = vsel %vm64, %v63, %v61
    %v67 = vlaneseq
    %v68 = vshrl.u32 %v67, 7
    %v69 = vsub.s32 1, %v68
    %v70 = vrot.slane %v35, %v69
    %v71 = vlaneseq
    %v72 = vshrl.u32 %v71, 7
    %v73 = vsub.s32 1, %v72
    %v74 = vrot.slane %v36, %v73
    %v75 = vmul.f32 %v66, %v70
    %v76 = vmul.f32 %v65, %v74
    %77 = vrot.lane.b32.xlu0 %v32, 15
    %v78 = vpop.permute.xlu0 %77
    %79 = vrot.lane.b32.xlu0 %v33, 15
    %v80 = vpop.permute.xlu0 %79
    %vm81 = vcmp.lt.s32.totalorder %v46, 15
    %v82 = vsel %vm81, %v78, %v80
    %v83 = vsel %vm81, %v80, %v78
    %v84 = vlaneseq
    %v85 = vshrl.u32 %v84, 7
    %v86 = vsub.s32 2, %v85
    %v87 = vrot.slane %v35, %v86
    %v88 = vlaneseq
    %v89 = vshrl.u32 %v88, 7
    %v90 = vsub.s32 2, %v89
    %v91 = vrot.slane %v36, %v90
    %v92 = vmul.f32 %v83, %v87
    %v93 = vmul.f32 %v82, %v91
    %94 = vrot.lane.b32.xlu0 %v32, 1
    %v95 = vpop.permute.xlu0 %94
    %96 = vrot.lane.b32.xlu0 %v33, 1
    %v97 = vpop.permute.xlu0 %96
    %vm98 = vcmp.lt.s32.totalorder %v46, 1
    %v99 = vsel %vm98, %v95, %v97
    %v100 = vsel %vm98, %v97, %v95
    %v101 = vlaneseq
    %v102 = vshrl.u32 %v101, 7
    %v103 = vsub.s32 3, %v102
    %v104 = vrot.slane %v35, %v103
    %v105 = vlaneseq
    %v106 = vshrl.u32 %v105, 7
    %v107 = vsub.s32 3, %v106
    %v108 = vrot.slane %v36, %v107
    %v109 = vmul.f32 %v100, %v104
    %v110 = vmul.f32 %v99, %v108
    %v111 = vlaneseq
    %v112 = vshrl.u32 %v111, 7
    %v113 = vsub.s32 4, %v112
    %v114 = vrot.slane %v35, %v113
    %v115 = vlaneseq
    %v116 = vshrl.u32 %v115, 7
    %v117 = vsub.s32 4, %v116
    %v118 = vrot.slane %v36, %v117
    %v119 = vmul.f32 %v32, %v114
    %v120 = vmul.f32 %v33, %v118
    %121 = vrot.lane.b32.xlu0 %v32, 127
    %v122 = vpop.permute.xlu0 %121
    %123 = vrot.lane.b32.xlu0 %v33, 127
    %v124 = vpop.permute.xlu0 %123
    %vm125 = vcmp.lt.s32.totalorder %v46, 127
    %v126 = vsel %vm125, %v122, %v124
    %v127 = vsel %vm125, %v124, %v122
    %v128 = vlaneseq
    %v129 = vshrl.u32 %v128, 7
    %v130 = vsub.s32 5, %v129
    %v131 = vrot.slane %v35, %v130
    %v132 = vlaneseq
    %v133 = vshrl.u32 %v132, 7
    %v134 = vsub.s32 5, %v133
    %v135 = vrot.slane %v36, %v134
    %v136 = vmul.f32 %v126, %v131
    %v137 = vmul.f32 %v127, %v135
    %138 = vrot.lane.b32.xlu0 %v32, 113
    %v139 = vpop.permute.xlu0 %138
    %140 = vrot.lane.b32.xlu0 %v33, 113
    %v141 = vpop.permute.xlu0 %140
    %vm142 = vcmp.lt.s32.totalorder %v46, 113
    %v143 = vsel %vm142, %v139, %v141
    %v144 = vsel %vm142, %v141, %v139
    %v145 = vlaneseq
    %v146 = vshrl.u32 %v145, 7
    %v147 = vsub.s32 6, %v146
    %v148 = vrot.slane %v35, %v147
    %v149 = vlaneseq
    %v150 = vshrl.u32 %v149, 7
    %v151 = vsub.s32 6, %v150
    %v152 = vrot.slane %v36, %v151
    %v153 = vmul.f32 %v143, %v148
    %v154 = vmul.f32 %v144, %v152
    %155 = vrot.lane.b32.xlu0 %v32, 112
    %v156 = vpop.permute.xlu0 %155
    %157 = vrot.lane.b32.xlu0 %v33, 112
    %v158 = vpop.permute.xlu0 %157
    %vm159 = vcmp.lt.s32.totalorder %v46, 112
    %v160 = vsel %vm159, %v156, %v158
    %v161 = vsel %vm159, %v158, %v156
    %v162 = vlaneseq
    %v163 = vshrl.u32 %v162, 7
    %v164 = vsub.s32 7, %v163
    %v165 = vrot.slane %v35, %v164
    %v166 = vlaneseq
    %v167 = vshrl.u32 %v166, 7
    %v168 = vsub.s32 7, %v167
    %v169 = vrot.slane %v36, %v168
    %v170 = vmul.f32 %v160, %v165
    %v171 = vmul.f32 %v161, %v169
    %172 = vrot.lane.b32.xlu0 %v32, 111
    %v173 = vpop.permute.xlu0 %172
    %174 = vrot.lane.b32.xlu0 %v33, 111
    %v175 = vpop.permute.xlu0 %174
    %vm176 = vcmp.lt.s32.totalorder %v46, 111
    %v177 = vsel %vm176, %v173, %v175
    %v178 = vsel %vm176, %v175, %v173
    %v179 = vlaneseq
    %v180 = vshrl.u32 %v179, 7
    %v181 = vsub.s32 0, %v180
    %v182 = vrot.slane %v37, %v181
    %v183 = vlaneseq
    %v184 = vshrl.u32 %v183, 7
    %v185 = vsub.s32 0, %v184
    %v186 = vrot.slane %v38, %v185
    %v187 = vmul.f32 %v177, %v182
    %v188 = vmul.f32 %v178, %v186
    %v189 = vld [vmem:[#allocation2] sm:$0xff]
    %v190 = vld [vmem:[#allocation2 + $0x8] sm:$0xff]
    %v191 = vpack.c.bf16 %v190, %v189
    %v192 = vpack.c.bf16 %v75, %v58
    %v193 = vpack.c.bf16 %v76, %v59
    %v194 = vpack.c.bf16 %v109, %v92
    %v195 = vpack.c.bf16 %v110, %v93
    %v196 = vpack.c.bf16 %v136, %v119
    %v197 = vpack.c.bf16 %v137, %v120
    %v198 = vpack.c.bf16 %v170, %v153
    %v199 = vpack.c.bf16 %v171, %v154
    %v200 = vpack.c.bf16 1.0, %v187
    %v201 = vpack.c.bf16 1.0, %v188
    %v202 = vpack.c.bf16 1.0, 1.0
    %203 = vmatprep.subr.bf16.mxu0 %v193
    %204 = vmatpush1.bf16.msra.mxu0 %v192
    %205 = vmatprep.subr.bf16.mxu0 %v195
    %206 = vmatpush1.bf16.msra.mxu0 %v194
    %207 = vmatprep.subr.bf16.mxu0 %v197
    %208 = vmatpush1.bf16.msra.mxu0 %v196
    %209 = vmatprep.subr.bf16.mxu0 %v199
    %210 = vmatpush1.bf16.msra.mxu0 %v198
    %211 = vmatprep.subr.bf16.mxu0 %v201
    %212 = vmatpush1.bf16.msra.mxu0 %v200
    %213 = vmatprep.subr.bf16.mxu0 %v202
    %214 = vmatpush1.bf16.msra.mxu0 %v202
    %215 = vmatprep.subr.bf16.mxu0 %v202
    %216 = vmatpush1.bf16.msra.mxu0 %v202
    %217 = vmatprep.subr.bf16.mxu0 %v202
    %218 = vmatpush1.bf16.msra.mxu0 %v202
    %219 = vmatprep.subr.bf16.mxu0 0
    %220 = vmatpush1.bf16.msra.mxu0 0
    %221 = vmatprep.subr.bf16.mxu0 0
    %222 = vmatpush1.bf16.msra.mxu0 0
    %223 = vmatprep.subr.bf16.mxu0 0
    %224 = vmatpush1.bf16.msra.mxu0 0
    %225 = vmatprep.subr.bf16.mxu0 0
    %226 = vmatpush1.bf16.msra.mxu0 0
    %227 = vmatprep.subr.bf16.mxu0 0
    %228 = vmatpush1.bf16.msra.mxu0 0
    %229 = vmatprep.subr.bf16.mxu0 0
    %230 = vmatpush1.bf16.msra.mxu0 0
    %231 = vmatprep.subr.bf16.mxu0 0
    %232 = vmatpush1.bf16.msra.mxu0 0
    %233 = vmatprep.subr.bf16.mxu0 0
    %234 = vmatpush1.bf16.msra.mxu0 0
    %235 = vmatprep.mubr.bf16.mxu0 0
    %236 = vmatmul.mubr.bf16.gmra.mrb[0].mxu0 %v191
    %v237 = vpop.f32.mrb[0].mxu0
    %v238 = vadd.f32 0.0, %v237
    %v239 = vpop.f32.mrb[0].mxu0
    %v240 = vadd.f32 0.0, %v239
    %v241 = vpop.f32.mrb[0].mxu0
    %v242 = vadd.f32 0.0, %v241
    %v243 = vpop.f32.mrb[0].mxu0
    %v244 = vadd.f32 0.0, %v243
    %245 = vdwg.mxu0
    %v246 = vmax.f32 %v238, 0.0
    %v247 = vmax.f32 %v240, 0.0
    %v248 = vmax.f32 %v242, 0.0
    %v249 = vmax.f32 %v244, 0.0
    %250 = vrot.lane.b32.xlu0 %v246, 17
    %v251 = vpop.permute.xlu0 %250
    %252 = vrot.lane.b32.xlu0 %v247, 17
    %v253 = vpop.permute.xlu0 %252
    %v254 = vsel %vm47, %v251, %v253
    %v255 = vsel %vm47, %v253, %v251
    %v256 = vmul.f32 %v255, %v53
    %v257 = vmul.f32 %v254, %v57
    %258 = vrot.lane.b32.xlu0 %v246, 16
    %v259 = vpop.permute.xlu0 %258
    %260 = vrot.lane.b32.xlu0 %v247, 16
    %v261 = vpop.permute.xlu0 %260
    %v262 = vsel %vm64, %v259, %v261
    %v263 = vsel %vm64, %v261, %v259
    %v264 = vmul.f32 %v263, %v70
    %v265 = vmul.f32 %v262, %v74
    %266 = vrot.lane.b32.xlu0 %v246, 15
    %v267 = vpop.permute.xlu0 %266
    %268 = vrot.lane.b32.xlu0 %v247, 15
    %v269 = vpop.permute.xlu0 %268
    %v270 = vsel %vm81, %v267, %v269
    %v271 = vsel %vm81, %v269, %v267
    %v272 = vmul.f32 %v271, %v87
    %v273 = vmul.f32 %v270, %v91
    %274 = vrot.lane.b32.xlu0 %v246, 1
    %v275 = vpop.permute.xlu0 %274
    %276 = vrot.lane.b32.xlu0 %v247, 1
    %v277 = vpop.permute.xlu0 %276
    %v278 = vsel %vm98, %v275, %v277
    %v279 = vsel %vm98, %v277, %v275
    %v280 = vmul.f32 %v279, %v104
    %v281 = vmul.f32 %v278, %v108
    %v282 = vmul.f32 %v246, %v114
    %v283 = vmul.f32 %v247, %v118
    %284 = vrot.lane.b32.xlu0 %v246, 127
    %v285 = vpop.permute.xlu0 %284
    %286 = vrot.lane.b32.xlu0 %v247, 127
    %v287 = vpop.permute.xlu0 %286
    %v288 = vsel %vm125, %v285, %v287
    %v289 = vsel %vm125, %v287, %v285
    %v290 = vmul.f32 %v288, %v131
    %v291 = vmul.f32 %v289, %v135
    %292 = vrot.lane.b32.xlu0 %v246, 113
    %v293 = vpop.permute.xlu0 %292
    %294 = vrot.lane.b32.xlu0 %v247, 113
    %v295 = vpop.permute.xlu0 %294
    %v296 = vsel %vm142, %v293, %v295
    %v297 = vsel %vm142, %v295, %v293
    %v298 = vmul.f32 %v296, %v148
    %v299 = vmul.f32 %v297, %v152
    %300 = vrot.lane.b32.xlu0 %v246, 112
    %v301 = vpop.permute.xlu0 %300
    %302 = vrot.lane.b32.xlu0 %v247, 112
    %v303 = vpop.permute.xlu0 %302
    %v304 = vsel %vm159, %v301, %v303
    %v305 = vsel %vm159, %v303, %v301
    %v306 = vmul.f32 %v304, %v165
    %v307 = vmul.f32 %v305, %v169
    %308 = vrot.lane.b32.xlu0 %v246, 111
    %v309 = vpop.permute.xlu0 %308
    %310 = vrot.lane.b32.xlu0 %v247, 111
    %v311 = vpop.permute.xlu0 %310
    %v312 = vsel %vm176, %v309, %v311
    %v313 = vsel %vm176, %v311, %v309
    %v314 = vmul.f32 %v312, %v182
    %v315 = vmul.f32 %v313, %v186
    %v316 = vld [vmem:[#allocation2 + $0x10] sm:$0xff]
    %v317 = vpack.c.bf16 %v316, %v316
    %v318 = vpack.c.bf16 %v264, %v256
    %v319 = vpack.c.bf16 %v265, %v257
    %v320 = vpack.c.bf16 %v280, %v272
    %v321 = vpack.c.bf16 %v281, %v273
    %v322 = vpack.c.bf16 %v290, %v282
    %v323 = vpack.c.bf16 %v291, %v283
    %v324 = vpack.c.bf16 %v306, %v298
    %v325 = vpack.c.bf16 %v307, %v299
    %v326 = vpack.c.bf16 1.0, %v314
    %v327 = vpack.c.bf16 1.0, %v315
    %328 = vmatprep.subr.bf16.mxu0 %v319
    %329 = vmatpush1.bf16.msra.mxu0 %v318
    %330 = vmatprep.subr.bf16.mxu0 %v321
    %331 = vmatpush1.bf16.msra.mxu0 %v320
    %332 = vmatprep.subr.bf16.mxu0 %v323
    %333 = vmatpush1.bf16.msra.mxu0 %v322
    %334 = vmatprep.subr.bf16.mxu0 %v325
    %335 = vmatpush1.bf16.msra.mxu0 %v324
    %336 = vmatprep.subr.bf16.mxu0 %v327
    %337 = vmatpush1.bf16.msra.mxu0 %v326
    %338 = vmatprep.subr.bf16.mxu0 %v202
    %339 = vmatpush1.bf16.msra.mxu0 %v202
    %340 = vmatprep.subr.bf16.mxu0 %v202
    %341 = vmatpush1.bf16.msra.mxu0 %v202
    %342 = vmatprep.subr.bf16.mxu0 %v202
    %343 = vmatpush1.bf16.msra.mxu0 %v202
    %344 = vmatprep.subr.bf16.mxu0 0
    %345 = vmatpush1.bf16.msra.mxu0 0
    %346 = vmatprep.subr.bf16.mxu0 0
    %347 = vmatpush1.bf16.msra.mxu0 0
    %348 = vmatprep.subr.bf16.mxu0 0
    %349 = vmatpush1.bf16.msra.mxu0 0
    %350 = vmatprep.subr.bf16.mxu0 0
    %351 = vmatpush1.bf16.msra.mxu0 0
    %352 = vmatprep.subr.bf16.mxu0 0
    %353 = vmatpush1.bf16.msra.mxu0 0
    %354 = vmatprep.subr.bf16.mxu0 0
    %355 = vmatpush1.bf16.msra.mxu0 0
    %356 = vmatprep.subr.bf16.mxu0 0
    %357 = vmatpush1.bf16.msra.mxu0 0
    %358 = vmatprep.subr.bf16.mxu0 0
    %359 = vmatpush1.bf16.msra.mxu0 0
    %360 = vmatprep.mubr.bf16.mxu0 0
    %361 = vmatmul.mubr.bf16.gmra.mrb[0].mxu0 %v317
    %v362 = vpop.f32.mrb[0].mxu0
    %v363 = vadd.f32 0.0, %v362
    %v364 = vpop.f32.mrb[0].mxu0
    %v365 = vadd.f32 0.0, %v364
    %v366 = vpop.f32.mrb[0].mxu0
    %v367 = vpop.f32.mrb[0].mxu0
    %368 = vdwg.mxu0
    %v369 = vmax.f32 %v363, 0.0
    %v370 = vmax.f32 %v365, 0.0
    %371 = vrot.lane.b32.xlu0 %v369, 17
    %v372 = vpop.permute.xlu0 %371
    %373 = vrot.lane.b32.xlu0 %v370, 17
    %v374 = vpop.permute.xlu0 %373
    %v375 = vsel %vm47, %v372, %v374
    %v376 = vsel %vm47, %v374, %v372
    %v377 = vmul.f32 %v376, %v53
    %v378 = vmul.f32 %v375, %v57
    %379 = vrot.lane.b32.xlu0 %v369, 16
    %v380 = vpop.permute.xlu0 %379
    %381 = vrot.lane.b32.xlu0 %v370, 16
    %v382 = vpop.permute.xlu0 %381
    %v383 = vsel %vm64, %v380, %v382
    %v384 = vsel %vm64, %v382, %v380
    %v385 = vmul.f32 %v384, %v70
    %v386 = vmul.f32 %v383, %v74
    %387 = vrot.lane.b32.xlu0 %v369, 15
    %v388 = vpop.permute.xlu0 %387
    %389 = vrot.lane.b32.xlu0 %v370, 15
    %v390 = vpop.permute.xlu0 %389
    %v391 = vsel %vm81, %v388, %v390
    %v392 = vsel %vm81, %v390, %v388
    %v393 = vmul.f32 %v392, %v87
    %v394 = vmul.f32 %v391, %v91
    %395 = vrot.lane.b32.xlu0 %v369, 1
    %v396 = vpop.permute.xlu0 %395
    %397 = vrot.lane.b32.xlu0 %v370, 1
    %v398 = vpop.permute.xlu0 %397
    %v399 = vsel %vm98, %v396, %v398
    %v400 = vsel %vm98, %v398, %v396
    %v401 = vmul.f32 %v400, %v104
    %v402 = vmul.f32 %v399, %v108
    %v403 = vmul.f32 %v369, %v114
    %v404 = vmul.f32 %v370, %v118
    %405 = vrot.lane.b32.xlu0 %v369, 127
    %v406 = vpop.permute.xlu0 %405
    %407 = vrot.lane.b32.xlu0 %v370, 127
    %v408 = vpop.permute.xlu0 %407
    %v409 = vsel %vm125, %v406, %v408
    %v410 = vsel %vm125, %v408, %v406
    %v411 = vmul.f32 %v409, %v131
    %v412 = vmul.f32 %v410, %v135
    %413 = vrot.lane.b32.xlu0 %v369, 113
    %v414 = vpop.permute.xlu0 %413
    %415 = vrot.lane.b32.xlu0 %v370, 113
    %v416 = vpop.permute.xlu0 %415
    %v417 = vsel %vm142, %v414, %v416
    %v418 = vsel %vm142, %v416, %v414
    %v419 = vmul.f32 %v417, %v148
    %v420 = vmul.f32 %v418, %v152
    %421 = vrot.lane.b32.xlu0 %v369, 112
    %v422 = vpop.permute.xlu0 %421
    %423 = vrot.lane.b32.xlu0 %v370, 112
    %v424 = vpop.permute.xlu0 %423
    %v425 = vsel %vm159, %v422, %v424
    %v426 = vsel %vm159, %v424, %v422
    %v427 = vmul.f32 %v425, %v165
    %v428 = vmul.f32 %v426, %v169
    %429 = vrot.lane.b32.xlu0 %v369, 111
    %v430 = vpop.permute.xlu0 %429
    %431 = vrot.lane.b32.xlu0 %v370, 111
    %v432 = vpop.permute.xlu0 %431
    %v433 = vsel %vm176, %v430, %v432
    %v434 = vsel %vm176, %v432, %v430
    %v435 = vmul.f32 %v433, %v182
    %v436 = vmul.f32 %v434, %v186
    %v437 = vld [vmem:[#allocation2 + $0x18] sm:$0x3]
    %v438 = vpack.c.bf16 %v437, %v437
    %v439 = vpack.c.bf16 %v385, %v377
    %v440 = vpack.c.bf16 %v386, %v378
    %v441 = vpack.c.bf16 %v401, %v393
    %v442 = vpack.c.bf16 %v402, %v394
    %v443 = vpack.c.bf16 %v411, %v403
    %v444 = vpack.c.bf16 %v412, %v404
    %v445 = vpack.c.bf16 %v427, %v419
    %v446 = vpack.c.bf16 %v428, %v420
    %v447 = vpack.c.bf16 1.0, %v435
    %v448 = vpack.c.bf16 1.0, %v436
    %449 = vmatprep.subr.bf16.mxu0 %v440
    %450 = vmatpush1.bf16.msra.mxu0 %v439
    %451 = vmatprep.subr.bf16.mxu0 %v442
    %452 = vmatpush1.bf16.msra.mxu0 %v441
    %453 = vmatprep.subr.bf16.mxu0 %v444
    %454 = vmatpush1.bf16.msra.mxu0 %v443
    %455 = vmatprep.subr.bf16.mxu0 %v446
    %456 = vmatpush1.bf16.msra.mxu0 %v445
    %457 = vmatprep.subr.bf16.mxu0 %v448
    %458 = vmatpush1.bf16.msra.mxu0 %v447
    %459 = vmatprep.subr.bf16.mxu0 %v202
    %460 = vmatpush1.bf16.msra.mxu0 %v202
    %461 = vmatprep.subr.bf16.mxu0 %v202
    %462 = vmatpush1.bf16.msra.mxu0 %v202
    %463 = vmatprep.subr.bf16.mxu0 %v202
    %464 = vmatpush1.bf16.msra.mxu0 %v202
    %465 = vmatprep.subr.bf16.mxu0 0
    %466 = vmatpush1.bf16.msra.mxu0 0
    %467 = vmatprep.subr.bf16.mxu0 0
    %468 = vmatpush1.bf16.msra.mxu0 0
    %469 = vmatprep.subr.bf16.mxu0 0
    %470 = vmatpush1.bf16.msra.mxu0 0
    %471 = vmatprep.subr.bf16.mxu0 0
    %472 = vmatpush1.bf16.msra.mxu0 0
    %473 = vmatprep.subr.bf16.mxu0 0
    %474 = vmatpush1.bf16.msra.mxu0 0
    %475 = vmatprep.subr.bf16.mxu0 0
    %476 = vmatpush1.bf16.msra.mxu0 0
    %477 = vmatprep.subr.bf16.mxu0 0
    %478 = vmatpush1.bf16.msra.mxu0 0
    %479 = vmatprep.subr.bf16.mxu0 0
    %480 = vmatpush1.bf16.msra.mxu0 0
    %481 = vmatprep.mubr.bf16.mxu0 0
    %482 = vmatmul.mubr.bf16.gmra.mrb[0].mxu0 %v438
    %v483 = vpop.f32.mrb[0].mxu0
    %v484 = vadd.f32 0.0, %v483
    %v485 = vpop.f32.mrb[0].mxu0
    %v486 = vadd.f32 0.0, %v485
    %v487 = vpop.f32.mrb[0].mxu0
    %v488 = vpop.f32.mrb[0].mxu0
    %489 = vdwg.mxu0
    %vm490 = vcmask 1041408
    %v491 = vsel %vm490, %v484, -inf
    %v492 = vsel %vm490, %v486, -inf
    %v493 = vmax.f32 %v491, %v492
    %494 = vmax.xlane.f32.xlu0 %v493
    %v495 = vpop.xlane.xlu0 %494
    %v496 = vsub.f32 %v484, %v495
    %v497 = vsub.f32 %v486, %v495
    %v498 = vmul.f32 %v496, 1.442695
    %v499 = vpow.pop %v498
    %v500 = vmul.f32 %v497, 1.442695
    %v501 = vpow.pop %v500
    %v502 = vsel %vm490, %v499, 0.0
    %v503 = vsel %vm490, %v501, 0.0
    %v504 = vadd.f32 %v502, %v503
    %505 = vadd.xlane.f32.xlu0 %v504
    %v506 = vpop.xlane.xlu0 %505
    %v507 = vlog2.pop %v506
    %v508 = vmul.f32 %v507, 0.6931472
    %v509 = vadd.f32 %v495, %v508
    %v510 = vsub.f32 %v484, %v509
    %v511 = vsub.f32 %v486, %v509
    %512 = vrot.lane.b32.xlu0 %v248, 127
    %v513 = vpop.permute.xlu0 %512
    %514 = vrot.lane.b32.xlu0 %v249, 127
    %v515 = vpop.permute.xlu0 %514
    %v516 = vsel %vm125, %v513, %v515
    %v517 = vsel %vm125, %v515, %v513
    %v518 = vmax.f32 %v248, %v516
    %v519 = vmax.f32 %v249, %v517
    %520 = vrot.lane.b32.xlu0 %v518, 112
    %v521 = vpop.permute.xlu0 %520
    %522 = vrot.lane.b32.xlu0 %v519, 112
    %v523 = vpop.permute.xlu0 %522
    %v524 = vsel %vm159, %v521, %v523
    %v525 = vsel %vm159, %v523, %v521
    %v526 = vmax.f32 %v518, %v524
    %v527 = vmax.f32 %v519, %v525
    %528 = vrot.lane.b32.xlu0 %v526, 34
    %v529 = vpop.permute.xlu0 %528
    %530 = vrot.lane.b32.xlu0 %v527, 34
    %v531 = vpop.permute.xlu0 %530
    %vm532 = vcmp.lt.s32.totalorder %v46, 34
    %v533 = vsel %vm532, %v529, %v531
    %v534 = vsel %vm532, %v531, %v529
    %v535 = vlaneseq
    %v536 = vshrl.u32 %v535, 7
    %v537 = vsub.s32 1, %v536
    %v538 = vrot.slane %v37, %v537
    %v539 = vlaneseq
    %v540 = vshrl.u32 %v539, 7
    %v541 = vsub.s32 1, %v540
    %v542 = vrot.slane %v38, %v541
    %v543 = vmul.f32 %v534, %v538
    %v544 = vmul.f32 %v533, %v542
    %545 = vrot.lane.b32.xlu0 %v526, 32
    %v546 = vpop.permute.xlu0 %545
    %547 = vrot.lane.b32.xlu0 %v527, 32
    %v548 = vpop.permute.xlu0 %547
    %vm549 = vcmp.lt.s32.totalorder %v46, 32
    %v550 = vsel %vm549, %v546, %v548
    %v551 = vsel %vm549, %v548, %v546
    %v552 = vlaneseq
    %v553 = vshrl.u32 %v552, 7
    %v554 = vsub.s32 2, %v553
    %v555 = vrot.slane %v37, %v554
    %v556 = vlaneseq
    %v557 = vshrl.u32 %v556, 7
    %v558 = vsub.s32 2, %v557
    %v559 = vrot.slane %v38, %v558
    %v560 = vmul.f32 %v551, %v555
    %v561 = vmul.f32 %v550, %v559
    %562 = vrot.lane.b32.xlu0 %v526, 30
    %v563 = vpop.permute.xlu0 %562
    %564 = vrot.lane.b32.xlu0 %v527, 30
    %v565 = vpop.permute.xlu0 %564
    %vm566 = vcmp.lt.s32.totalorder %v46, 30
    %v567 = vsel %vm566, %v563, %v565
    %v568 = vsel %vm566, %v565, %v563
    %v569 = vlaneseq
    %v570 = vshrl.u32 %v569, 7
    %v571 = vsub.s32 3, %v570
    %v572 = vrot.slane %v37, %v571
    %v573 = vlaneseq
    %v574 = vshrl.u32 %v573, 7
    %v575 = vsub.s32 3, %v574
    %v576 = vrot.slane %v38, %v575
    %v577 = vmul.f32 %v568, %v572
    %v578 = vmul.f32 %v567, %v576
    %579 = vrot.lane.b32.xlu0 %v526, 2
    %v580 = vpop.permute.xlu0 %579
    %581 = vrot.lane.b32.xlu0 %v527, 2
    %v582 = vpop.permute.xlu0 %581
    %vm583 = vcmp.lt.s32.totalorder %v46, 2
    %v584 = vsel %vm583, %v580, %v582
    %v585 = vsel %vm583, %v582, %v580
    %v586 = vlaneseq
    %v587 = vshrl.u32 %v586, 7
    %v588 = vsub.s32 4, %v587
    %v589 = vrot.slane %v37, %v588
    %v590 = vlaneseq
    %v591 = vshrl.u32 %v590, 7
    %v592 = vsub.s32 4, %v591
    %v593 = vrot.slane %v38, %v592
    %v594 = vmul.f32 %v585, %v589
    %v595 = vmul.f32 %v584, %v593
    %v596 = vlaneseq
    %v597 = vshrl.u32 %v596, 7
    %v598 = vsub.s32 5, %v597
    %v599 = vrot.slane %v37, %v598
    %v600 = vlaneseq
    %v601 = vshrl.u32 %v600, 7
    %v602 = vsub.s32 5, %v601
    %v603 = vrot.slane %v38, %v602
    %v604 = vmul.f32 %v526, %v599
    %v605 = vmul.f32 %v527, %v603
    %606 = vrot.lane.b32.xlu0 %v526, 126
    %v607 = vpop.permute.xlu0 %606
    %608 = vrot.lane.b32.xlu0 %v527, 126
    %v609 = vpop.permute.xlu0 %608
    %vm610 = vcmp.lt.s32.totalorder %v46, 126
    %v611 = vsel %vm610, %v607, %v609
    %v612 = vsel %vm610, %v609, %v607
    %v613 = vlaneseq
    %v614 = vshrl.u32 %v613, 7
    %v615 = vsub.s32 6, %v614
    %v616 = vrot.slane %v37, %v615
    %v617 = vlaneseq
    %v618 = vshrl.u32 %v617, 7
    %v619 = vsub.s32 6, %v618
    %v620 = vrot.slane %v38, %v619
    %v621 = vmul.f32 %v611, %v616
    %v622 = vmul.f32 %v612, %v620
    %623 = vrot.lane.b32.xlu0 %v526, 98
    %v624 = vpop.permute.xlu0 %623
    %625 = vrot.lane.b32.xlu0 %v527, 98
    %v626 = vpop.permute.xlu0 %625
    %vm627 = vcmp.lt.s32.totalorder %v46, 98
    %v628 = vsel %vm627, %v624, %v626
    %v629 = vsel %vm627, %v626, %v624
    %v630 = vlaneseq
    %v631 = vshrl.u32 %v630, 7
    %v632 = vsub.s32 7, %v631
    %v633 = vrot.slane %v37, %v632
    %v634 = vlaneseq
    %v635 = vshrl.u32 %v634, 7
    %v636 = vsub.s32 7, %v635
    %v637 = vrot.slane %v38, %v636
    %v638 = vmul.f32 %v628, %v633
    %v639 = vmul.f32 %v629, %v637
    %640 = vrot.lane.b32.xlu0 %v526, 96
    %v641 = vpop.permute.xlu0 %640
    %642 = vrot.lane.b32.xlu0 %v527, 96
    %v643 = vpop.permute.xlu0 %642
    %vm644 = vcmp.lt.s32.totalorder %v46, 96
    %v645 = vsel %vm644, %v641, %v643
    %v646 = vsel %vm644, %v643, %v641
    %v647 = vlaneseq
    %v648 = vshrl.u32 %v647, 7
    %v649 = vsub.s32 0, %v648
    %v650 = vrot.slane %v39, %v649
    %v651 = vlaneseq
    %v652 = vshrl.u32 %v651, 7
    %v653 = vsub.s32 0, %v652
    %v654 = vrot.slane %v40, %v653
    %v655 = vmul.f32 %v645, %v650
    %v656 = vmul.f32 %v646, %v654
    %657 = vrot.lane.b32.xlu0 %v526, 94
    %v658 = vpop.permute.xlu0 %657
    %659 = vrot.lane.b32.xlu0 %v527, 94
    %v660 = vpop.permute.xlu0 %659
    %vm661 = vcmp.lt.s32.totalorder %v46, 94
    %v662 = vsel %vm661, %v658, %v660
    %v663 = vsel %vm661, %v660, %v658
    %v664 = vlaneseq
    %v665 = vshrl.u32 %v664, 7
    %v666 = vsub.s32 1, %v665
    %v667 = vrot.slane %v39, %v666
    %v668 = vlaneseq
    %v669 = vshrl.u32 %v668, 7
    %v670 = vsub.s32 1, %v669
    %v671 = vrot.slane %v40, %v670
    %v672 = vmul.f32 %v662, %v667
    %v673 = vmul.f32 %v663, %v671
    %v674 = vld [vmem:[#allocation2 + $0x1a] sm:$0xff]
    %v675 = vpack.c.bf16 %v674, %v674
    %v676 = vpack.c.bf16 %v560, %v543
    %v677 = vpack.c.bf16 %v561, %v544
    %v678 = vpack.c.bf16 %v594, %v577
    %v679 = vpack.c.bf16 %v595, %v578
    %v680 = vpack.c.bf16 %v621, %v604
    %v681 = vpack.c.bf16 %v622, %v605
    %v682 = vpack.c.bf16 %v655, %v638
    %v683 = vpack.c.bf16 %v656, %v639
    %v684 = vpack.c.bf16 1.0, %v672
    %v685 = vpack.c.bf16 1.0, %v673
    %686 = vmatprep.subr.bf16.mxu0 %v677
    %687 = vmatpush1.bf16.msra.mxu0 %v676
    %688 = vmatprep.subr.bf16.mxu0 %v679
    %689 = vmatpush1.bf16.msra.mxu0 %v678
    %690 = vmatprep.subr.bf16.mxu0 %v681
    %691 = vmatpush1.bf16.msra.mxu0 %v680
    %692 = vmatprep.subr.bf16.mxu0 %v683
    %693 = vmatpush1.bf16.msra.mxu0 %v682
    %694 = vmatprep.subr.bf16.mxu0 %v685
    %695 = vmatpush1.bf16.msra.mxu0 %v684
    %696 = vmatprep.subr.bf16.mxu0 %v202
    %697 = vmatpush1.bf16.msra.mxu0 %v202
    %698 = vmatprep.subr.bf16.mxu0 %v202
    %699 = vmatpush1.bf16.msra.mxu0 %v202
    %700 = vmatprep.subr.bf16.mxu0 %v202
    %701 = vmatpush1.bf16.msra.mxu0 %v202
    %702 = vmatprep.subr.bf16.mxu0 0
    %703 = vmatpush1.bf16.msra.mxu0 0
    %704 = vmatprep.subr.bf16.mxu0 0
    %705 = vmatpush1.bf16.msra.mxu0 0
    %706 = vmatprep.subr.bf16.mxu0 0
    %707 = vmatpush1.bf16.msra.mxu0 0
    %708 = vmatprep.subr.bf16.mxu0 0
    %709 = vmatpush1.bf16.msra.mxu0 0
    %710 = vmatprep.subr.bf16.mxu0 0
    %711 = vmatpush1.bf16.msra.mxu0 0
    %712 = vmatprep.subr.bf16.mxu0 0
    %713 = vmatpush1.bf16.msra.mxu0 0
    %714 = vmatprep.subr.bf16.mxu0 0
    %715 = vmatpush1.bf16.msra.mxu0 0
    %716 = vmatprep.subr.bf16.mxu0 0
    %717 = vmatpush1.bf16.msra.mxu0 0
    %718 = vmatprep.mubr.bf16.mxu0 0
    %719 = vmatmul.mubr.bf16.gmra.mrb[0].mxu0 %v675
    %v720 = vpop.f32.mrb[0].mxu0
    %v721 = vadd.f32 0.0, %v720
    %v722 = vpop.f32.mrb[0].mxu0
    %v723 = vadd.f32 0.0, %v722
    %v724 = vpop.f32.mrb[0].mxu0
    %v725 = vpop.f32.mrb[0].mxu0
    %726 = vdwg.mxu0
    %v727 = vmax.f32 %v721, 0.0
    %v728 = vmax.f32 %v723, 0.0
    %729 = vrot.lane.b32.xlu0 %v727, 126
    %v730 = vpop.permute.xlu0 %729
    %731 = vrot.lane.b32.xlu0 %v728, 126
    %v732 = vpop.permute.xlu0 %731
    %v733 = vsel %vm610, %v730, %v732
    %v734 = vsel %vm610, %v732, %v730
    %v735 = vmax.f32 %v727, %v733
    %v736 = vmax.f32 %v728, %v734
    %737 = vrot.lane.b32.xlu0 %v735, 96
    %v738 = vpop.permute.xlu0 %737
    %739 = vrot.lane.b32.xlu0 %v736, 96
    %v740 = vpop.permute.xlu0 %739
    %v741 = vsel %vm644, %v738, %v740
    %v742 = vsel %vm644, %v740, %v738
    %v743 = vmax.f32 %v735, %v741
    %v744 = vmax.f32 %v736, %v742
    %v745 = vld [vmem:[#allocation2 + $0x22] sm:$0xff]
    %v746 = vld [vmem:[#allocation2 + $0x2a] sm:$0xff]
    %v747 = vld [vmem:[#allocation2 + $0x32] sm:$0xff]
    %v748 = vld [vmem:[#allocation2 + $0x3a] sm:$0xff]
    %v749 = vld [vmem:[#allocation2 + $0x42] sm:$0xff]
    %v750 = vld [vmem:[#allocation2 + $0x4a] sm:$0xff]
    %v751 = vld [vmem:[#allocation2 + $0x52] sm:$0xff]
    %v752 = vld [vmem:[#allocation2 + $0x5a] sm:$0xff]
    %v753 = vld [vmem:[#allocation2 + $0x62] sm:$0xff]
    %v754 = vld [vmem:[#allocation2 + $0x6a] sm:$0xff]
    %v755 = vld [vmem:[#allocation2 + $0x72] sm:$0xff]
    %v756 = vld [vmem:[#allocation2 + $0x7a] sm:$0xff]
    %v757 = vld [vmem:[#allocation2 + $0x82] sm:$0xff]
    %v758 = vld [vmem:[#allocation2 + $0x8a] sm:$0xff]
    %v759 = vld [vmem:[#allocation2 + $0x92] sm:$0xff]
    %v760 = vld [vmem:[#allocation2 + $0x9a] sm:$0xff]
    %v761 = vld [vmem:[#allocation2 + $0xa2] sm:$0xff]
    %v762 = vld [vmem:[#allocation2 + $0xaa] sm:$0xff]
    %v763 = vld [vmem:[#allocation2 + $0xb2] sm:$0xff]
    %v764 = vld [vmem:[#allocation2 + $0xba] sm:$0xff]
    %v765 = vld [vmem:[#allocation2 + $0xc2] sm:$0xff]
    %v766 = vld [vmem:[#allocation2 + $0xca] sm:$0xff]
    %v767 = vld [vmem:[#allocation2 + $0xd2] sm:$0xff]
    %v768 = vld [vmem:[#allocation2 + $0xda] sm:$0xff]
    %v769 = vld [vmem:[#allocation2 + $0xe2] sm:$0xff]
    %v770 = vld [vmem:[#allocation2 + $0xea] sm:$0xff]
    %v771 = vld [vmem:[#allocation2 + $0xf2] sm:$0xff]
    %v772 = vld [vmem:[#allocation2 + $0xfa] sm:$0xff]
    %v773 = vld [vmem:[#allocation2 + $0x102] sm:$0xff]
    %v774 = vld [vmem:[#allocation2 + $0x10a] sm:$0xff]
    %v775 = vld [vmem:[#allocation2 + $0x112] sm:$0xff]
    %v776 = vld [vmem:[#allocation2 + $0x11a] sm:$0xff]
    %777 = vmatprep.subr.mxu0 0.0
    %778 = vmatpush1.msra.mxu0 %v745
    %779 = vmatprep.subr.mxu0 0.0
    %780 = vmatpush1.msra.mxu0 %v746
    %781 = vmatprep.subr.mxu0 0.0
    %782 = vmatpush1.msra.mxu0 %v747
    %783 = vmatprep.subr.mxu0 0.0
    %784 = vmatpush1.msra.mxu0 %v748
    %785 = vmatprep.subr.mxu0 0.0
    %786 = vmatpush1.msra.mxu0 %v749
    %787 = vmatprep.subr.mxu0 0.0
    %788 = vmatpush1.msra.mxu0 %v750
    %789 = vmatprep.subr.mxu0 0.0
    %790 = vmatpush1.msra.mxu0 %v751
    %791 = vmatprep.subr.mxu0 0.0
    %792 = vmatpush1.msra.mxu0 %v752
    %793 = vmatprep.subr.mxu0 0.0
    %794 = vmatpush1.msra.mxu0 %v753
    %795 = vmatprep.subr.mxu0 0.0
    %796 = vmatpush1.msra.mxu0 %v754
    %797 = vmatprep.subr.mxu0 0.0
    %798 = vmatpush1.msra.mxu0 %v755
    %799 = vmatprep.subr.mxu0 0.0
    %800 = vmatpush1.msra.mxu0 %v756
    %801 = vmatprep.subr.mxu0 0.0
    %802 = vmatpush1.msra.mxu0 %v757
    %803 = vmatprep.subr.mxu0 0.0
    %804 = vmatpush1.msra.mxu0 %v758
    %805 = vmatprep.subr.mxu0 0.0
    %806 = vmatpush1.msra.mxu0 %v759
    %807 = vmatprep.subr.mxu0 0.0
    %808 = vmatpush1.msra.mxu0 %v760
    %809 = vmatprep.subr.mxu0 0.0
    %810 = vmatpush1.msra.mxu0 %v761
    %811 = vmatprep.subr.mxu0 0.0
    %812 = vmatpush1.msra.mxu0 %v762
    %813 = vmatprep.subr.mxu0 0.0
    %814 = vmatpush1.msra.mxu0 %v763
    %815 = vmatprep.subr.mxu0 0.0
    %816 = vmatpush1.msra.mxu0 %v764
    %817 = vmatprep.subr.mxu0 0.0
    %818 = vmatpush1.msra.mxu0 %v765
    %819 = vmatprep.subr.mxu0 0.0
    %820 = vmatpush1.msra.mxu0 %v766
    %821 = vmatprep.subr.mxu0 0.0
    %822 = vmatpush1.msra.mxu0 %v767
    %823 = vmatprep.subr.mxu0 0.0
    %824 = vmatpush1.msra.mxu0 %v768
    %825 = vmatprep.subr.mxu0 0.0
    %826 = vmatpush1.msra.mxu0 %v769
    %827 = vmatprep.subr.mxu0 0.0
    %828 = vmatpush1.msra.mxu0 %v770
    %829 = vmatprep.subr.mxu0 0.0
    %830 = vmatpush1.msra.mxu0 %v771
    %831 = vmatprep.subr.mxu0 0.0
    %832 = vmatpush1.msra.mxu0 %v772
    %833 = vmatprep.subr.mxu0 0.0
    %834 = vmatpush1.msra.mxu0 %v773
    %835 = vmatprep.subr.mxu0 0.0
    %836 = vmatpush1.msra.mxu0 %v774
    %837 = vmatprep.subr.mxu0 0.0
    %838 = vmatpush1.msra.mxu0 %v775
    %839 = vmatprep.subr.mxu0 0.0
    %840 = vmatpush1.msra.mxu0 %v776
    %841 = vmatprep.mubr.f32.mxu0 %v744
    %842 = vmatmul.mubr.f32.gmra.mrb[0].mxu0 %v743
    %v843 = vpop.f32.mrb[0].mxu0
    %v844 = vadd.f32 0.0, %v843
    %v845 = vpop.f32.mrb[0].mxu0
    %846 = vdwg.mxu0
    %v847 = vld [vmem:[#allocation2 + $0x122] sm:$0xff]
    %v848 = vmul.f32 %v844, %v847
    %v849 = vld [vmem:[#allocation2 + $0x12a] sm:$0xff]
    %v850 = vld [vmem:[#allocation2 + $0x132] sm:$0xff]
    %v851 = vld [vmem:[#allocation2 + $0x13a] sm:$0xff]
    %v852 = vld [vmem:[#allocation2 + $0x142] sm:$0xff]
    %v853 = vld [vmem:[#allocation2 + $0x14a] sm:$0xff]
    %v854 = vld [vmem:[#allocation2 + $0x152] sm:$0xff]
    %v855 = vld [vmem:[#allocation2 + $0x15a] sm:$0xff]
    %v856 = vld [vmem:[#allocation2 + $0x162] sm:$0xff]
    %v857 = vld [vmem:[#allocation2 + $0x16a] sm:$0xff]
    %v858 = vld [vmem:[#allocation2 + $0x172] sm:$0xff]
    %v859 = vld [vmem:[#allocation2 + $0x17a] sm:$0xff]
    %v860 = vld [vmem:[#allocation2 + $0x182] sm:$0xff]
    %v861 = vld [vmem:[#allocation2 + $0x18a] sm:$0xff]
    %v862 = vld [vmem:[#allocation2 + $0x192] sm:$0xff]
    %v863 = vld [vmem:[#allocation2 + $0x19a] sm:$0xff]
    %v864 = vld [vmem:[#allocation2 + $0x1a2] sm:$0xff]
    %865 = vmatprep.subr.mxu0 0.0
    %866 = vmatpush1.msra.mxu0 %v849
    %867 = vmatprep.subr.mxu0 0.0
    %868 = vmatpush1.msra.mxu0 %v850
    %869 = vmatprep.subr.mxu0 0.0
    %870 = vmatpush1.msra.mxu0 %v851
    %871 = vmatprep.subr.mxu0 0.0
    %872 = vmatpush1.msra.mxu0 %v852
    %873 = vmatprep.subr.mxu0 0.0
    %874 = vmatpush1.msra.mxu0 %v853
    %875 = vmatprep.subr.mxu0 0.0
    %876 = vmatpush1.msra.mxu0 %v854
    %877 = vmatprep.subr.mxu0 0.0
    %878 = vmatpush1.msra.mxu0 %v855
    %879 = vmatprep.subr.mxu0 0.0
    %880 = vmatpush1.msra.mxu0 %v856
    %881 = vmatprep.subr.mxu0 0.0
    %882 = vmatpush1.msra.mxu0 %v857
    %883 = vmatprep.subr.mxu0 0.0
    %884 = vmatpush1.msra.mxu0 %v858
    %885 = vmatprep.subr.mxu0 0.0
    %886 = vmatpush1.msra.mxu0 %v859
    %887 = vmatprep.subr.mxu0 0.0
    %888 = vmatpush1.msra.mxu0 %v860
    %889 = vmatprep.subr.mxu0 0.0
    %890 = vmatpush1.msra.mxu0 %v861
    %891 = vmatprep.subr.mxu0 0.0
    %892 = vmatpush1.msra.mxu0 %v862
    %893 = vmatprep.subr.mxu0 0.0
    %894 = vmatpush1.msra.mxu0 %v863
    %895 = vmatprep.subr.mxu0 0.0
    %896 = vmatpush1.msra.mxu0 %v864
    %897 = vmatprep.subr.mxu0 0.0
    %898 = vmatpush1.msra.mxu0 0.0
    %899 = vmatprep.subr.mxu0 0.0
    %900 = vmatpush1.msra.mxu0 0.0
    %901 = vmatprep.subr.mxu0 0.0
    %902 = vmatpush1.msra.mxu0 0.0
    %903 = vmatprep.subr.mxu0 0.0
    %904 = vmatpush1.msra.mxu0 0.0
    %905 = vmatprep.subr.mxu0 0.0
    %906 = vmatpush1.msra.mxu0 0.0
    %907 = vmatprep.subr.mxu0 0.0
    %908 = vmatpush1.msra.mxu0 0.0
    %909 = vmatprep.subr.mxu0 0.0
    %910 = vmatpush1.msra.mxu0 0.0
    %911 = vmatprep.subr.mxu0 0.0
    %912 = vmatpush1.msra.mxu0 0.0
    %913 = vmatprep.subr.mxu0 0.0
    %914 = vmatpush1.msra.mxu0 0.0
    %915 = vmatprep.subr.mxu0 0.0
    %916 = vmatpush1.msra.mxu0 0.0
    %917 = vmatprep.subr.mxu0 0.0
    %918 = vmatpush1.msra.mxu0 0.0
    %919 = vmatprep.subr.mxu0 0.0
    %920 = vmatpush1.msra.mxu0 0.0
    %921 = vmatprep.subr.mxu0 0.0
    %922 = vmatpush1.msra.mxu0 0.0
    %923 = vmatprep.subr.mxu0 0.0
    %924 = vmatpush1.msra.mxu0 0.0
    %925 = vmatprep.subr.mxu0 0.0
    %926 = vmatpush1.msra.mxu0 0.0
    %927 = vmatprep.subr.mxu0 0.0
    %928 = vmatpush1.msra.mxu0 0.0
    %929 = vmatprep.mubr.f32.mxu0 0.0
    %930 = vmatmul.mubr.f32.gmra.mrb[0].mxu0 %v848
    %v931 = vpop.f32.mrb[0].mxu0
    %v932 = vadd.f32 0.0, %v931
    %v933 = vpop.f32.mrb[0].mxu0
    %934 = vdwg.mxu0
    %vm935 = vcmask 1043456
    %v936 = vsel %vm935, %v932, 0.0
    %v937 = vrot.slane %v936, 4
    %v938 = vadd.f32 %v936, %v937
    %v939 = vrot.slane %v938, 2
    %v940 = vadd.f32 %v938, %v939
    %v941 = vrot.slane %v940, 1
    %v942 = vadd.f32 %v940, %v941
    %v944 = vrot.slane %v932, 4
    %v946 = vsel %vm935, %v944, 0.0
    %v947 = vrot.slane %v946, 4
    %v948 = vadd.f32 %v946, %v947
    %v949 = vrot.slane %v948, 2
    %v950 = vadd.f32 %v948, %v949
    %v951 = vrot.slane %v950, 1
    %v952 = vadd.f32 %v950, %v951
    %vm953 = vcmask 1040384
    %v954 = vsel %vm953, %v942, %v952
    %v955 = vld [vmem:[#allocation2 + $0x1aa] sm:$0x1]
    %v956 = vlaneseq
    %v957 = vshrl.u32 %v956, 7
    %v958 = vsub.s32 0, %v957
    %v959 = vrot.slane %v955, %v958
    %v960 = vadd.f32 %v954, %v959
    %v961 = vmax.f32 %v960, 0.0
    %v962 = vld [vmem:[#allocation2 + $0x1ab] sm:$0xff]
    %v963 = vld [vmem:[#allocation2 + $0x1b3] sm:$0xff]
    %v964 = vld [vmem:[#allocation2 + $0x1bb] sm:$0xff]
    %v965 = vld [vmem:[#allocation2 + $0x1c3] sm:$0xff]
    %v966 = vld [vmem:[#allocation2 + $0x1cb] sm:$0xff]
    %v967 = vld [vmem:[#allocation2 + $0x1d3] sm:$0xff]
    %v968 = vld [vmem:[#allocation2 + $0x1db] sm:$0xff]
    %v969 = vld [vmem:[#allocation2 + $0x1e3] sm:$0xff]
    %v970 = vld [vmem:[#allocation2 + $0x1eb] sm:$0xff]
    %v971 = vld [vmem:[#allocation2 + $0x1f3] sm:$0xff]
    %v972 = vld [vmem:[#allocation2 + $0x1fb] sm:$0xff]
    %v973 = vld [vmem:[#allocation2 + $0x203] sm:$0xff]
    %v974 = vld [vmem:[#allocation2 + $0x20b] sm:$0xff]
    %v975 = vld [vmem:[#allocation2 + $0x213] sm:$0xff]
    %v976 = vld [vmem:[#allocation2 + $0x21b] sm:$0xff]
    %v977 = vld [vmem:[#allocation2 + $0x223] sm:$0xff]
    %v978 = vld [vmem:[#allocation2 + $0x22b] sm:$0x1]
    %v979 = vlaneseq
    %v980 = vshrl.u32 %v979, 7
    %v981 = vsub.s32 0, %v980
    %v982 = vrot.slane %v978, %v981
    %983 = vmatprep.subr.mxu0 0.0
    %984 = vmatpush1.msra.mxu0 %v962
    %985 = vmatprep.subr.mxu0 0.0
    %986 = vmatpush1.msra.mxu0 %v963
    %987 = vmatprep.subr.mxu0 0.0
    %988 = vmatpush1.msra.mxu0 %v964
    %989 = vmatprep.subr.mxu0 0.0
    %990 = vmatpush1.msra.mxu0 %v965
    %991 = vmatprep.subr.mxu0 0.0
    %992 = vmatpush1.msra.mxu0 %v966
    %993 = vmatprep.subr.mxu0 0.0
    %994 = vmatpush1.msra.mxu0 %v967
    %995 = vmatprep.subr.mxu0 0.0
    %996 = vmatpush1.msra.mxu0 %v968
    %997 = vmatprep.subr.mxu0 0.0
    %998 = vmatpush1.msra.mxu0 %v969
    %999 = vmatprep.subr.mxu0 0.0
    %1000 = vmatpush1.msra.mxu0 %v970
    %1001 = vmatprep.subr.mxu0 0.0
    %1002 = vmatpush1.msra.mxu0 %v971
    %1003 = vmatprep.subr.mxu0 0.0
    %1004 = vmatpush1.msra.mxu0 %v972
    %1005 = vmatprep.subr.mxu0 0.0
    %1006 = vmatpush1.msra.mxu0 %v973
    %1007 = vmatprep.subr.mxu0 0.0
    %1008 = vmatpush1.msra.mxu0 %v974
    %1009 = vmatprep.subr.mxu0 0.0
    %1010 = vmatpush1.msra.mxu0 %v975
    %1011 = vmatprep.subr.mxu0 0.0
    %1012 = vmatpush1.msra.mxu0 %v976
    %1013 = vmatprep.subr.mxu0 0.0
    %1014 = vmatpush1.msra.mxu0 %v977
    %1015 = vmatprep.subr.mxu0 0.0
    %1016 = vmatpush1.msra.mxu0 0.0
    %1017 = vmatprep.subr.mxu0 0.0
    %1018 = vmatpush1.msra.mxu0 0.0
    %1019 = vmatprep.subr.mxu0 0.0
    %1020 = vmatpush1.msra.mxu0 0.0
    %1021 = vmatprep.subr.mxu0 0.0
    %1022 = vmatpush1.msra.mxu0 0.0
    %1023 = vmatprep.subr.mxu0 0.0
    %1024 = vmatpush1.msra.mxu0 0.0
    %1025 = vmatprep.subr.mxu0 0.0
    %1026 = vmatpush1.msra.mxu0 0.0
    %1027 = vmatprep.subr.mxu0 0.0
    %1028 = vmatpush1.msra.mxu0 0.0
    %1029 = vmatprep.subr.mxu0 0.0
    %1030 = vmatpush1.msra.mxu0 0.0
    %1031 = vmatprep.subr.mxu0 0.0
    %1032 = vmatpush1.msra.mxu0 0.0
    %1033 = vmatprep.subr.mxu0 0.0
    %1034 = vmatpush1.msra.mxu0 0.0
    %1035 = vmatprep.subr.mxu0 0.0
    %1036 = vmatpush1.msra.mxu0 0.0
    %1037 = vmatprep.subr.mxu0 0.0
    %1038 = vmatpush1.msra.mxu0 0.0
    %1039 = vmatprep.subr.mxu0 0.0
    %1040 = vmatpush1.msra.mxu0 0.0
    %1041 = vmatprep.subr.mxu0 0.0
    %1042 = vmatpush1.msra.mxu0 0.0
    %1043 = vmatprep.subr.mxu0 0.0
    %1044 = vmatpush1.msra.mxu0 0.0
    %1045 = vmatprep.subr.mxu0 0.0
    %1046 = vmatpush1.msra.mxu0 0.0
    %1047 = vmatprep.mubr.f32.mxu0 0.0
    %1048 = vmatmul.mubr.f32.gmra.mrb[0].mxu0 %v961
    %v1049 = vpop.f32.mrb[0].mxu0
    %v1050 = vadd.f32 %v982, %v1049
    %v1051 = vpop.f32.mrb[0].mxu0
    %1052 = vdwg.mxu0
    %v1053 = vmax.f32 %v1050, 0.0
    %v1054 = vld [vmem:[#allocation2 + $0x22c] sm:$0xff]
    %v1055 = vld [vmem:[#allocation2 + $0x234] sm:$0xff]
    %v1056 = vld [vmem:[#allocation2 + $0x23c] sm:$0xff]
    %v1057 = vld [vmem:[#allocation2 + $0x244] sm:$0xff]
    %v1058 = vld [vmem:[#allocation2 + $0x24c] sm:$0xff]
    %v1059 = vld [vmem:[#allocation2 + $0x254] sm:$0xff]
    %v1060 = vld [vmem:[#allocation2 + $0x25c] sm:$0xff]
    %v1061 = vld [vmem:[#allocation2 + $0x264] sm:$0xff]
    %v1062 = vld [vmem:[#allocation2 + $0x26c] sm:$0xff]
    %v1063 = vld [vmem:[#allocation2 + $0x274] sm:$0xff]
    %v1064 = vld [vmem:[#allocation2 + $0x27c] sm:$0xff]
    %v1065 = vld [vmem:[#allocation2 + $0x284] sm:$0xff]
    %v1066 = vld [vmem:[#allocation2 + $0x28c] sm:$0xff]
    %v1067 = vld [vmem:[#allocation2 + $0x294] sm:$0xff]
    %v1068 = vld [vmem:[#allocation2 + $0x29c] sm:$0xff]
    %v1069 = vld [vmem:[#allocation2 + $0x2a4] sm:$0xff]
    %v1070 = vld [vmem:[#allocation2 + $0x2ac] sm:$0x1]
    %v1071 = vlaneseq
    %v1072 = vshrl.u32 %v1071, 7
    %v1073 = vsub.s32 0, %v1072
    %v1074 = vrot.slane %v1070, %v1073
    %1075 = vmatprep.subr.mxu0 0.0
    %1076 = vmatpush1.msra.mxu0 %v1054
    %1077 = vmatprep.subr.mxu0 0.0
    %1078 = vmatpush1.msra.mxu0 %v1055
    %1079 = vmatprep.subr.mxu0 0.0
    %1080 = vmatpush1.msra.mxu0 %v1056
    %1081 = vmatprep.subr.mxu0 0.0
    %1082 = vmatpush1.msra.mxu0 %v1057
    %1083 = vmatprep.subr.mxu0 0.0
    %1084 = vmatpush1.msra.mxu0 %v1058
    %1085 = vmatprep.subr.mxu0 0.0
    %1086 = vmatpush1.msra.mxu0 %v1059
    %1087 = vmatprep.subr.mxu0 0.0
    %1088 = vmatpush1.msra.mxu0 %v1060
    %1089 = vmatprep.subr.mxu0 0.0
    %1090 = vmatpush1.msra.mxu0 %v1061
    %1091 = vmatprep.subr.mxu0 0.0
    %1092 = vmatpush1.msra.mxu0 %v1062
    %1093 = vmatprep.subr.mxu0 0.0
    %1094 = vmatpush1.msra.mxu0 %v1063
    %1095 = vmatprep.subr.mxu0 0.0
    %1096 = vmatpush1.msra.mxu0 %v1064
    %1097 = vmatprep.subr.mxu0 0.0
    %1098 = vmatpush1.msra.mxu0 %v1065
    %1099 = vmatprep.subr.mxu0 0.0
    %1100 = vmatpush1.msra.mxu0 %v1066
    %1101 = vmatprep.subr.mxu0 0.0
    %1102 = vmatpush1.msra.mxu0 %v1067
    %1103 = vmatprep.subr.mxu0 0.0
    %1104 = vmatpush1.msra.mxu0 %v1068
    %1105 = vmatprep.subr.mxu0 0.0
    %1106 = vmatpush1.msra.mxu0 %v1069
    %1107 = vmatprep.subr.mxu0 0.0
    %1108 = vmatpush1.msra.mxu0 0.0
    %1109 = vmatprep.subr.mxu0 0.0
    %1110 = vmatpush1.msra.mxu0 0.0
    %1111 = vmatprep.subr.mxu0 0.0
    %1112 = vmatpush1.msra.mxu0 0.0
    %1113 = vmatprep.subr.mxu0 0.0
    %1114 = vmatpush1.msra.mxu0 0.0
    %1115 = vmatprep.subr.mxu0 0.0
    %1116 = vmatpush1.msra.mxu0 0.0
    %1117 = vmatprep.subr.mxu0 0.0
    %1118 = vmatpush1.msra.mxu0 0.0
    %1119 = vmatprep.subr.mxu0 0.0
    %1120 = vmatpush1.msra.mxu0 0.0
    %1121 = vmatprep.subr.mxu0 0.0
    %1122 = vmatpush1.msra.mxu0 0.0
    %1123 = vmatprep.subr.mxu0 0.0
    %1124 = vmatpush1.msra.mxu0 0.0
    %1125 = vmatprep.subr.mxu0 0.0
    %1126 = vmatpush1.msra.mxu0 0.0
    %1127 = vmatprep.subr.mxu0 0.0
    %1128 = vmatpush1.msra.mxu0 0.0
    %1129 = vmatprep.subr.mxu0 0.0
    %1130 = vmatpush1.msra.mxu0 0.0
    %1131 = vmatprep.subr.mxu0 0.0
    %1132 = vmatpush1.msra.mxu0 0.0
    %1133 = vmatprep.subr.mxu0 0.0
    %1134 = vmatpush1.msra.mxu0 0.0
    %1135 = vmatprep.subr.mxu0 0.0
    %1136 = vmatpush1.msra.mxu0 0.0
    %1137 = vmatprep.subr.mxu0 0.0
    %1138 = vmatpush1.msra.mxu0 0.0
    %1139 = vmatprep.mubr.f32.mxu0 0.0
    %1140 = vmatmul.mubr.f32.gmra.mrb[0].mxu0 %v1053
    %v1141 = vpop.f32.mrb[0].mxu0
    %v1142 = vadd.f32 %v1074, %v1141
    %v1143 = vpop.f32.mrb[0].mxu0
    %1144 = vdwg.mxu0
    %v1145 = vmul.f32 %v1142, 1.442695
    %v1146 = vpow.pop %v1145
    %v1147 = vmul.f32 %v1146, 500.0
    %1149 = vrot.lane.b32.xlu0 %v1146, 125
    %v1150 = vpop.permute.xlu0 %1149
    %v1152 = vmax.f32 %v1146, %v1150
    %v1153 = vsub.f32 %v1146, %v1152
    %v1154 = vmul.f32 %v1153, 1.442695
    %v1155 = vpow.pop %v1154
    %1157 = vrot.lane.b32.xlu0 %v1152, 3
    %v1158 = vpop.permute.xlu0 %1157
    %v1160 = vsub.f32 %v1146, %v1158
    %v1161 = vmul.f32 %v1160, 1.442695
    %v1162 = vpow.pop %v1161
    %1164 = vrot.lane.b32.xlu0 %v1162, 125
    %v1165 = vpop.permute.xlu0 %1164
    %v1167 = vadd.f32 %v1155, %v1165
    %v1168 = vrcp.pop %v1167
    %v1169 = vmul.f32 1.0, %v1168
    %v1170 = vmul.f32 %v1155, %v1169
    %1172 = vrot.lane.b32.xlu0 %v1169, 3
    %v1173 = vpop.permute.xlu0 %1172
    %v1175 = vmul.f32 %v1162, %v1173
    %v1176 = vlog2.pop %v1146
    %v1177 = vmul.f32 %v1176, 0.6931472
    %v1178 = vadd.f32 %v1146, 1.0
    %v1179 = vlog2.pop %v1178
    %v1180 = vmul.f32 %v1179, 0.6931472
    %v1181 = vadd.f32 %v1177, %v1180
    %v1182 = vadd.f32 %v1146, 2.0
    %v1183 = vlog2.pop %v1182
    %v1184 = vmul.f32 %v1183, 0.6931472
    %v1185 = vadd.f32 %v1181, %v1184
    %v1186 = vadd.f32 %v1146, 3.0
    %v1187 = vlog2.pop %v1186
    %v1188 = vmul.f32 %v1187, 0.6931472
    %v1189 = vadd.f32 %v1185, %v1188
    %v1190 = vadd.f32 %v1146, 4.0
    %v1191 = vlog2.pop %v1190
    %v1192 = vmul.f32 %v1191, 0.6931472
    %v1193 = vadd.f32 %v1189, %v1192
    %v1194 = vadd.f32 %v1146, 5.0
    %v1195 = vlog2.pop %v1194
    %v1196 = vmul.f32 %v1195, 0.6931472
    %v1197 = vadd.f32 %v1193, %v1196
    %v1198 = vadd.f32 %v1146, 6.0
    %v1199 = vlog2.pop %v1198
    %v1200 = vmul.f32 %v1199, 0.6931472
    %v1201 = vadd.f32 %v1197, %v1200
    %v1202 = vadd.f32 %v1146, 7.0
    %v1203 = vlog2.pop %v1202
    %v1204 = vmul.f32 %v1203, 0.6931472
    %v1205 = vadd.f32 %v1201, %v1204
    %v1206 = vadd.f32 %v1146, 8.0
    %v1207 = vrcp.pop %v1206
    %v1208 = vmul.f32 1.0, %v1207
    %v1209 = vmul.f32 %v1208, %v1208
    %v1210 = vmul.f32 %v1209, 0.0007936508
    %v1211 = vadd.f32 %v1210, -0.0027777778
    %v1212 = vmul.f32 %v1209, %v1211
    %v1213 = vadd.f32 %v1212, 0.083333336
    %v1214 = vmul.f32 %v1208, %v1213
    %v1215 = vsub.f32 %v1206, 0.5
    %v1216 = vlog2.pop %v1206
    %v1217 = vmul.f32 %v1216, 0.6931472
    %v1218 = vmul.f32 %v1215, %v1217
    %v1219 = vsub.f32 %v1218, %v1206
    %v1220 = vadd.f32 %v1219, 0.9189385
    %v1221 = vadd.f32 %v1220, %v1214
    %v1222 = vsub.f32 %v1221, %v1205
    %v1223 = vsub.f32 0.0, %v1222
    %1225 = vrot.lane.b32.xlu0 %v1177, 127
    %v1226 = vpop.permute.xlu0 %1225
    %v1228 = vmul.f32 %v1146, %v1226
    %v1229 = vsub.f32 %v1223, %v1228
    %v1230 = vlog2.pop %v1147
    %v1231 = vmul.f32 %v1230, 0.6931472
    %1233 = vrot.lane.b32.xlu0 %v1231, 127
    %v1234 = vpop.permute.xlu0 %1233
    %v1236 = vmul.f32 %v1146, %v1234
    %v1237 = vsub.f32 %v1223, %v1236
    %v1238 = vsub.f32 %v1146, 1.0
    %1240 = vset.pattern.permute.xlu0 0
    %1241 = vperm.xlu0 %1240, %v1238
    %v1242 = vpop.permute.xlu0 %1241
    %v1244 = vlaneseq
    %v1245 = vshrl.u32 %v1244, 7
    %v1246 = vsub.s32 3, %v1245
    %v1247 = vrot.slane %v39, %v1246
    %v1248 = vlaneseq
    %v1249 = vshrl.u32 %v1248, 7
    %v1250 = vsub.s32 3, %v1249
    %v1251 = vrot.slane %v40, %v1250
    %v1252 = vmul.f32 %v1242, %v1247
    %v1253 = vmul.f32 %v1242, %v1251
    %1255 = vset.pattern.permute.xlu0 0
    %1256 = vperm.xlu0 %1255, %v1229
    %v1257 = vpop.permute.xlu0 %1256
    %v1259 = vadd.f32 %v1257, %v1252
    %v1260 = vadd.f32 %v1257, %v1253
    %v1261 = vrcp.pop %v1146
    %v1262 = vmul.f32 1.0, %v1261
    %v1263 = vlaneseq
    %v1264 = vshrl.u32 %v1263, 7
    %v1265 = vsub.s32 2, %v1264
    %v1266 = vrot.slane %v39, %v1265
    %v1267 = vlaneseq
    %v1268 = vshrl.u32 %v1267, 7
    %v1269 = vsub.s32 2, %v1268
    %v1270 = vrot.slane %v40, %v1269
    %1272 = vset.pattern.permute.xlu0 1
    %1273 = vperm.xlu0 %1272, %v1262
    %v1274 = vpop.permute.xlu0 %1273
    %v1276 = vmul.f32 %v1266, %v1274
    %v1277 = vmul.f32 %v1270, %v1274
    %v1278 = vsub.f32 %v1259, %v1276
    %v1279 = vsub.f32 %v1260, %v1277
    %1280 = vset.pattern.permute.xlu0 3
    %1281 = vperm.xlu0 %1280, %v1238
    %v1282 = vpop.permute.xlu0 %1281
    %v1284 = vmul.f32 %v1282, %v1247
    %v1285 = vmul.f32 %v1282, %v1251
    %1287 = vset.pattern.permute.xlu0 3
    %1288 = vperm.xlu0 %1287, %v1237
    %v1289 = vpop.permute.xlu0 %1288
    %v1291 = vadd.f32 %v1289, %v1284
    %v1292 = vadd.f32 %v1289, %v1285
    %v1293 = vrcp.pop %v1147
    %v1294 = vmul.f32 1.0, %v1293
    %1296 = vset.pattern.permute.xlu0 4
    %1297 = vperm.xlu0 %1296, %v1294
    %v1298 = vpop.permute.xlu0 %1297
    %v1300 = vmul.f32 %v1266, %v1298
    %v1301 = vmul.f32 %v1270, %v1298
    %v1302 = vsub.f32 %v1291, %v1300
    %v1303 = vsub.f32 %v1292, %v1301
    %v1304 = vmax.f32 %v1278, %v1302
    %v1305 = vmax.f32 %v1279, %v1303
    %v1306 = vsub.f32 %v1278, %v1304
    %v1307 = vsub.f32 %v1279, %v1305
    %v1308 = vmul.f32 %v1306, 1.442695
    %v1309 = vpow.pop %v1308
    %v1310 = vmul.f32 %v1307, 1.442695
    %v1311 = vpow.pop %v1310
    %1313 = vset.pattern.permute.xlu0 2
    %1314 = vperm.xlu0 %1313, %v1170
    %v1315 = vpop.permute.xlu0 %1314
    %v1317 = vmul.f32 %v1315, %v1309
    %v1318 = vmul.f32 %v1315, %v1311
    %v1319 = vsub.f32 %v1302, %v1304
    %v1320 = vsub.f32 %v1303, %v1305
    %v1321 = vmul.f32 %v1319, 1.442695
    %v1322 = vpow.pop %v1321
    %v1323 = vmul.f32 %v1320, 1.442695
    %v1324 = vpow.pop %v1323
    %1326 = vset.pattern.permute.xlu0 5
    %1327 = vperm.xlu0 %1326, %v1175
    %v1328 = vpop.permute.xlu0 %1327
    %v1330 = vmul.f32 %v1328, %v1322
    %v1331 = vmul.f32 %v1328, %v1324
    %v1332 = vadd.f32 %v1317, %v1330
    %v1333 = vadd.f32 %v1318, %v1331
    %v1334 = vlog2.pop %v1332
    %v1335 = vmul.f32 %v1334, 0.6931472
    %v1336 = vlog2.pop %v1333
    %v1337 = vmul.f32 %v1336, 0.6931472
    %v1338 = vadd.f32 %v1304, %v1335
    %v1339 = vadd.f32 %v1305, %v1337
    %1341 = vrot.lane.b32.xlu0 %v34, 6
    %v1342 = vpop.permute.xlu0 %1341
    %v1344 = vadd.f32 %v1142, %v1342
    %1345 = vrot.lane.b32.xlu0 %v34, 9
    %v1346 = vpop.permute.xlu0 %1345
    %v1348 = vadd.f32 %v1142, %v1346
    %v1349 = vmin.f32 %v1146, 3.75
    %v1350 = vmul.f32 %v1349, 0.26666668
    %v1351 = vmul.f32 %v1350, %v1350
    %v1352 = vmul.f32 %v1351, 0.0045813
    %v1353 = vadd.f32 %v1352, 0.0360768
    %v1354 = vmul.f32 %v1351, %v1353
    %v1355 = vadd.f32 %v1354, 0.2659732
    %v1356 = vmul.f32 %v1351, %v1355
    %v1357 = vadd.f32 %v1356, 1.2067492
    %v1358 = vmul.f32 %v1351, %v1357
    %v1359 = vadd.f32 %v1358, 3.0899425
    %v1360 = vmul.f32 %v1351, %v1359
    %v1361 = vadd.f32 %v1360, 3.5156229
    %v1362 = vmul.f32 %v1351, %v1361
    %v1363 = vadd.f32 %v1362, 1.0
    %v1364 = vlog2.pop %v1363
    %v1365 = vmul.f32 %v1364, 0.6931472
    %v1366 = vmax.f32 %v1146, 3.75
    %v1367 = vrcp.pop %v1366
    %v1368 = vmul.f32 3.75, %v1367
    %v1369 = vmul.f32 %v1368, 0.00392377
    %v1370 = vadd.f32 %v1369, -0.01647633
    %v1371 = vmul.f32 %v1368, %v1370
    %v1372 = vadd.f32 %v1371, 0.02635537
    %v1373 = vmul.f32 %v1368, %v1372
    %v1374 = vadd.f32 %v1373, -0.02057706
    %v1375 = vmul.f32 %v1368, %v1374
    %v1376 = vadd.f32 %v1375, 0.00916281
    %v1377 = vmul.f32 %v1368, %v1376
    %v1378 = vadd.f32 %v1377, -0.00157565
    %v1379 = vmul.f32 %v1368, %v1378
    %v1380 = vadd.f32 %v1379, 0.00225319
    %v1381 = vmul.f32 %v1368, %v1380
    %v1382 = vadd.f32 %v1381, 0.01328592
    %v1383 = vmul.f32 %v1368, %v1382
    %v1384 = vadd.f32 %v1383, 0.3989423
    %v1385 = vlog2.pop %v1366
    %v1386 = vmul.f32 %v1385, 0.6931472
    %v1387 = vmul.f32 %v1386, 0.5
    %v1388 = vsub.f32 %v1366, %v1387
    %v1389 = vlog2.pop %v1384
    %v1390 = vmul.f32 %v1389, 0.6931472
    %v1391 = vadd.f32 %v1388, %v1390
    %vm1392 = vcmp.le.f32.partialorder %v1146, 3.75
    %v1393 = vsel %vm1392, %v1365, %v1391
    %v1394 = vadd.f32 %v1393, 1.837877
    %v1395 = vsub.f32 0.0, %v1394
    %v1396 = vmul.f32 %v1344, 0.15915494
    %v1397 = vadd.f32 %v1396, 0.5
    %v1398 = vfloor.f32 %v1397
    %v1399 = vmul.f32 %v1398, 6.2831855
    %v1400 = vsub.f32 %v1344, %v1399
    %v1401 = vmul.f32 %v1400, %v1400
    %v1402 = vmul.f32 %v1401, 1.6059044e-10
    %v1403 = vadd.f32 %v1402, -2.5052108e-08
    %v1404 = vmul.f32 %v1401, %v1403
    %v1405 = vadd.f32 %v1404, 2.7557319e-06
    %v1406 = vmul.f32 %v1401, %v1405
    %v1407 = vadd.f32 %v1406, -0.0001984127
    %v1408 = vmul.f32 %v1401, %v1407
    %v1409 = vadd.f32 %v1408, 0.008333334
    %v1410 = vmul.f32 %v1401, %v1409
    %v1411 = vadd.f32 %v1410, -0.16666667
    %v1412 = vmul.f32 %v1401, %v1411
    %v1413 = vadd.f32 %v1412, 1.0
    %v1414 = vmul.f32 %v1400, %v1413
    %v1415 = vmul.f32 %v1401, -1.1470745e-11
    %v1416 = vadd.f32 %v1415, 2.0876756e-09
    %v1417 = vmul.f32 %v1401, %v1416
    %v1418 = vadd.f32 %v1417, -2.755732e-07
    %v1419 = vmul.f32 %v1401, %v1418
    %v1420 = vadd.f32 %v1419, 2.4801588e-05
    %v1421 = vmul.f32 %v1401, %v1420
    %v1422 = vadd.f32 %v1421, -0.0013888889
    %v1423 = vmul.f32 %v1401, %v1422
    %v1424 = vadd.f32 %v1423, 0.041666668
    %v1425 = vmul.f32 %v1401, %v1424
    %v1426 = vadd.f32 %v1425, -0.5
    %v1427 = vmul.f32 %v1401, %v1426
    %v1428 = vadd.f32 %v1427, 1.0
    %v1429 = vmul.f32 %v1348, 0.15915494
    %v1430 = vadd.f32 %v1429, 0.5
    %v1431 = vfloor.f32 %v1430
    %v1432 = vmul.f32 %v1431, 6.2831855
    %v1433 = vsub.f32 %v1348, %v1432
    %v1434 = vmul.f32 %v1433, %v1433
    %v1435 = vmul.f32 %v1434, 1.6059044e-10
    %v1436 = vadd.f32 %v1435, -2.5052108e-08
    %v1437 = vmul.f32 %v1434, %v1436
    %v1438 = vadd.f32 %v1437, 2.7557319e-06
    %v1439 = vmul.f32 %v1434, %v1438
    %v1440 = vadd.f32 %v1439, -0.0001984127
    %v1441 = vmul.f32 %v1434, %v1440
    %v1442 = vadd.f32 %v1441, 0.008333334
    %v1443 = vmul.f32 %v1434, %v1442
    %v1444 = vadd.f32 %v1443, -0.16666667
    %v1445 = vmul.f32 %v1434, %v1444
    %v1446 = vadd.f32 %v1445, 1.0
    %v1447 = vmul.f32 %v1433, %v1446
    %v1448 = vmul.f32 %v1434, -1.1470745e-11
    %v1449 = vadd.f32 %v1448, 2.0876756e-09
    %v1450 = vmul.f32 %v1434, %v1449
    %v1451 = vadd.f32 %v1450, -2.755732e-07
    %v1452 = vmul.f32 %v1434, %v1451
    %v1453 = vadd.f32 %v1452, 2.4801588e-05
    %v1454 = vmul.f32 %v1434, %v1453
    %v1455 = vadd.f32 %v1454, -0.0013888889
    %v1456 = vmul.f32 %v1434, %v1455
    %v1457 = vadd.f32 %v1456, 0.041666668
    %v1458 = vmul.f32 %v1434, %v1457
    %v1459 = vadd.f32 %v1458, -0.5
    %v1460 = vmul.f32 %v1434, %v1459
    %v1461 = vadd.f32 %v1460, 1.0
    %v1462 = vlaneseq
    %v1463 = vshrl.u32 %v1462, 7
    %v1464 = vsub.s32 4, %v1463
    %v1465 = vrot.slane %v39, %v1464
    %v1466 = vlaneseq
    %v1467 = vshrl.u32 %v1466, 7
    %v1468 = vsub.s32 4, %v1467
    %v1469 = vrot.slane %v40, %v1468
    %1471 = vset.pattern.permute.xlu0 6
    %1472 = vperm.xlu0 %1471, %v1428
    %v1473 = vpop.permute.xlu0 %1472
    %v1475 = vmul.f32 %v1465, %v1473
    %v1476 = vmul.f32 %v1469, %v1473
    %v1477 = vlaneseq
    %v1478 = vshrl.u32 %v1477, 7
    %v1479 = vsub.s32 5, %v1478
    %v1480 = vrot.slane %v39, %v1479
    %v1481 = vlaneseq
    %v1482 = vshrl.u32 %v1481, 7
    %v1483 = vsub.s32 5, %v1482
    %v1484 = vrot.slane %v40, %v1483
    %1486 = vset.pattern.permute.xlu0 6
    %1487 = vperm.xlu0 %1486, %v1414
    %v1488 = vpop.permute.xlu0 %1487
    %v1490 = vmul.f32 %v1480, %v1488
    %v1491 = vmul.f32 %v1484, %v1488
    %v1492 = vadd.f32 %v1475, %v1490
    %v1493 = vadd.f32 %v1476, %v1491
    %1494 = vset.pattern.permute.xlu0 7
    %1495 = vperm.xlu0 %1494, %v1146
    %v1496 = vpop.permute.xlu0 %1495
    %v1498 = vmul.f32 %v1496, %v1492
    %v1499 = vmul.f32 %v1496, %v1493
    %1501 = vset.pattern.permute.xlu0 7
    %1502 = vperm.xlu0 %1501, %v1395
    %v1503 = vpop.permute.xlu0 %1502
    %v1505 = vadd.f32 %v1498, %v1503
    %v1506 = vadd.f32 %v1499, %v1503
    %1508 = vset.pattern.permute.xlu0 9
    %1509 = vperm.xlu0 %1508, %v1461
    %v1510 = vpop.permute.xlu0 %1509
    %v1512 = vmul.f32 %v1465, %v1510
    %v1513 = vmul.f32 %v1469, %v1510
    %1515 = vset.pattern.permute.xlu0 9
    %1516 = vperm.xlu0 %1515, %v1447
    %v1517 = vpop.permute.xlu0 %1516
    %v1519 = vmul.f32 %v1480, %v1517
    %v1520 = vmul.f32 %v1484, %v1517
    %v1521 = vadd.f32 %v1512, %v1519
    %v1522 = vadd.f32 %v1513, %v1520
    %1523 = vset.pattern.permute.xlu0 10
    %1524 = vperm.xlu0 %1523, %v1146
    %v1525 = vpop.permute.xlu0 %1524
    %v1527 = vmul.f32 %v1525, %v1521
    %v1528 = vmul.f32 %v1525, %v1522
    %1529 = vset.pattern.permute.xlu0 10
    %1530 = vperm.xlu0 %1529, %v1395
    %v1531 = vpop.permute.xlu0 %1530
    %v1533 = vadd.f32 %v1527, %v1531
    %v1534 = vadd.f32 %v1528, %v1531
    %v1535 = vmax.f32 %v1505, %v1533
    %v1536 = vmax.f32 %v1506, %v1534
    %v1537 = vsub.f32 %v1505, %v1535
    %v1538 = vsub.f32 %v1506, %v1536
    %v1539 = vmul.f32 %v1537, 1.442695
    %v1540 = vpow.pop %v1539
    %v1541 = vmul.f32 %v1538, 1.442695
    %v1542 = vpow.pop %v1541
    %1543 = vset.pattern.permute.xlu0 8
    %1544 = vperm.xlu0 %1543, %v1170
    %v1545 = vpop.permute.xlu0 %1544
    %v1547 = vmul.f32 %v1545, %v1540
    %v1548 = vmul.f32 %v1545, %v1542
    %v1549 = vsub.f32 %v1533, %v1535
    %v1550 = vsub.f32 %v1534, %v1536
    %v1551 = vmul.f32 %v1549, 1.442695
    %v1552 = vpow.pop %v1551
    %v1553 = vmul.f32 %v1550, 1.442695
    %v1554 = vpow.pop %v1553
    %1555 = vset.pattern.permute.xlu0 11
    %1556 = vperm.xlu0 %1555, %v1175
    %v1557 = vpop.permute.xlu0 %1556
    %v1559 = vmul.f32 %v1557, %v1552
    %v1560 = vmul.f32 %v1557, %v1554
    %v1561 = vadd.f32 %v1547, %v1559
    %v1562 = vadd.f32 %v1548, %v1560
    %v1563 = vlog2.pop %v1561
    %v1564 = vmul.f32 %v1563, 0.6931472
    %v1565 = vlog2.pop %v1562
    %v1566 = vmul.f32 %v1565, 0.6931472
    %v1567 = vadd.f32 %v1535, %v1564
    %v1568 = vadd.f32 %v1536, %v1566
    %v1569 = vadd.f32 %v1338, %v1567
    %v1570 = vadd.f32 %v1339, %v1568
    %v1571 = vsel %vm490, %v1569, -inf
    %v1572 = vsel %vm490, %v1570, -inf
    %v1573 = vmax.f32 %v1571, %v1572
    %1574 = vmax.xlane.f32.xlu0 %v1573
    %v1575 = vpop.xlane.xlu0 %1574
    %v1576 = vsub.f32 %v1569, %v1575
    %v1577 = vsub.f32 %v1570, %v1575
    %v1578 = vmul.f32 %v1576, 1.442695
    %v1579 = vpow.pop %v1578
    %v1580 = vmul.f32 %v1577, 1.442695
    %v1581 = vpow.pop %v1580
    %v1582 = vsel %vm490, %v1579, 0.0
    %v1583 = vsel %vm490, %v1581, 0.0
    %v1584 = vadd.f32 %v1582, %v1583
    %1585 = vadd.xlane.f32.xlu0 %v1584
    %v1586 = vpop.xlane.xlu0 %1585
    %v1587 = vlog2.pop %v1586
    %v1588 = vmul.f32 %v1587, 0.6931472
    %v1589 = vadd.f32 %v1575, %v1588
    %v1590 = vsub.f32 %v1569, %v1589
    %v1591 = vsub.f32 %v1570, %v1589
    %v1594 = vcombine.low %v510, %v511
    %1596 = vst [vmem:[%s4] sm:$0x33] %v1594
    %v1599 = vcombine.low %v1590, %v1591
    %v1600 = vrot.slane %v1599, 6
    %1602 = vst [vmem:[%s4] sm:$0xcc] %v1600
    // Predicated region
    $region22: #{conv_joint_model_forward.1} parent=1 // pred_check
      _
    $region23: #{conv_joint_model_forward.1} parent=1 // pred_check_branch
      %1604 = sbr.rel (0) target = $region25
    $region24: #{conv_joint_model_forward.1} parent=1 // pred_region
      _
    $region25: #{conv_joint_model_forward.1} parent=1 // pred_fallthru
      _
    // Predicated region
    $region26: #{conv_joint_model_forward.1} parent=1 // pred_check
      _
    $region27: #{conv_joint_model_forward.1} parent=1 // pred_check_branch
      %1606 = sbr.rel (0) target = $region29
    $region28: #{conv_joint_model_forward.1} parent=1 // pred_region
      _
    $region29: #{conv_joint_model_forward.1} parent=1 // pred_fallthru
      _
    %1607 = vsyncpa [#allocation3], 1

</llo_original>
